<compile_context>
chip_gen: v7x
topology: tpu7x:2x2x1
jax: 0.10.0
libtpu: 0.0.40
codegen_flags: <defaults>
</compile_context>

<pallas_src>
import math

import jax
import jax.numpy as jnp
from jax import lax
from jax.experimental import pallas as pl
from jax.experimental.pallas import tpu as pltpu


# ------------------------------- kernel ------------------------------------ #

def _mlp_fused_kernel(x_ref, wu_ref, wv_ref, su_ref, sv_ref, wo_ref,
                      o_ref, u_acc, v_acc, y_acc):
    """Fused u/v projection + SiLU gate + o_proj + L2 normalize.

    Grid = (M tiles [parallel], hidden tiles j [arbitrary], dim tiles k [arbitrary]).
    u_acc/v_acc are (tm, tn) f32 reduction accumulators over k;
    y_acc is a (tm, C) f32 accumulator resident across both j and k.
    """
    j = pl.program_id(1)
    k = pl.program_id(2)
    nj = pl.num_programs(1)
    nk = pl.num_programs(2)

    @pl.when(jnp.logical_and(j == 0, k == 0))
    def _():
        y_acc[...] = jnp.zeros_like(y_acc)

    @pl.when(k == 0)
    def _():
        u_acc[...] = jnp.zeros_like(u_acc)
        v_acc[...] = jnp.zeros_like(v_acc)

    x = x_ref[...]                          # (tm, tk) — one load feeds both matmuls
    u_acc[...] += jnp.dot(x, wu_ref[...], preferred_element_type=jnp.float32)
    v_acc[...] += jnp.dot(x, wv_ref[...], preferred_element_type=jnp.float32)

    @pl.when(k == nk - 1)
    def _():
        u = u_acc[...] * su_ref[...]                                   # f32 epilogue
        v = v_acc[...] * sv_ref[...]                                   # sv folds dim**0.5
        gate = v * pl.reciprocal(1.0 + jnp.exp(-v), approx=True)       # silu(v); EUP
        h = (u * gate).astype(wo_ref.dtype)                            # bf16 feed to MXU
        y_acc[...] += jnp.dot(h, wo_ref[...], preferred_element_type=jnp.float32)

    @pl.when(jnp.logical_and(j == nj - 1, k == nk - 1))
    def _():
        y = y_acc[...]
        ssq = jnp.sum(y * y, axis=-1, keepdims=True)
        # y / max(||y||, 1e-12)  ==  y * rsqrt(max(ssq, 1e-24))   (EUP rsqrt)
        inv = lax.rsqrt(jnp.maximum(ssq, 1e-24))
        o_ref[...] = (y * inv).astype(o_ref.dtype)                     # lane-dense store


# ------------------------------- wrappers ----------------------------------- #

def _round_up(x, m):
    return ((x + m - 1) // m) * m


def _pick_tile(full, target, align):
    """Largest multiple of `align` that divides `full` and is <= target, else full."""
    if full <= target:
        return full
    t = min(target, full)
    t -= t % align
    while t >= align:
        if full % t == 0:
            return t
        t -= align
    return full


def prepare_mlp_params(Wu, Wv, Wo, su, sv, *, restore_scale_su=1.0,
                       restore_scale_sv=1.0, compute_dtype=jnp.bfloat16):
    """One-time weight prep: transpose + cast hoisted out of the hot path."""
    Hd, C = Wu.shape
    assert Wv.shape == (Hd, C) and Wo.shape == (C, Hd)
    return dict(
        wu_t=Wu.T.astype(compute_dtype),                                # (C, Hd)
        wv_t=Wv.T.astype(compute_dtype),                                # (C, Hd)
        wo_t=Wo.T.astype(compute_dtype),                                # (Hd, C)
        su_row=(su * restore_scale_su).reshape(1, Hd).astype(jnp.float32),
        sv_row=(sv * restore_scale_sv * (C ** 0.5)).reshape(1, Hd).astype(jnp.float32),
    )


def mlp_forward(x, params, *, tm=256, tn=512, tk=512):
    """Pallas implementation of MLP.forward (dropout_p treated as 0.0)."""
    wu_t, wv_t, wo_t = params["wu_t"], params["wv_t"], params["wo_t"]
    su_row, sv_row = params["su_row"], params["sv_row"]
    C, Hd = wu_t.shape
    B, T, Cx = x.shape
    assert Cx == C
    M = B * T
    cdt = wu_t.dtype

    # Pad rows so the M tile is a clean multiple of 128 (8 for tiny M); padded
    # rows are zero -> y=0 -> normalized to 0, sliced off at the end.
    row_align = 128 if M >= 128 else 8
    Mp = _round_up(M, row_align)
    x2d = x.reshape(M, C).astype(cdt)
    if Mp != M:
        x2d = jnp.pad(x2d, ((0, Mp - M), (0, 0)))

    tm_target = tm
    if Mp >= 2 * row_align:
        tm_target = min(tm_target, Mp // 2)   # keep >=2 parallel M steps (v7x megacore)
    tm_ = _pick_tile(Mp, tm_target, row_align)
    tn_ = _pick_tile(Hd, tn, 128)
    tk_ = _pick_tile(C, tk, 128)
    grid = (Mp // tm_, Hd // tn_, C // tk_)

    out_dtype = x.dtype
    itemsize = lambda a: jnp.dtype(a.dtype).itemsize
    cost = pl.CostEstimate(
        flops=6 * M * C * Hd,                      # u, v, o matmuls
        transcendentals=M * Hd,                    # exp in silu
        bytes_accessed=(x2d.size * itemsize(x2d) + wu_t.size * itemsize(wu_t)
                        + wv_t.size * itemsize(wv_t) + wo_t.size * itemsize(wo_t)
                        + Mp * C * jnp.dtype(out_dtype).itemsize))

    y = pl.pallas_call(
        _mlp_fused_kernel,
        out_shape=jax.ShapeDtypeStruct((Mp, C), out_dtype),
        grid_spec=pltpu.PrefetchScalarGridSpec(
            num_scalar_prefetch=0,
            grid=grid,
            in_specs=[
                pl.BlockSpec((tm_, tk_), lambda i, j, k: (i, k)),   # x
                pl.BlockSpec((tk_, tn_), lambda i, j, k: (k, j)),   # Wu.T
                pl.BlockSpec((tk_, tn_), lambda i, j, k: (k, j)),   # Wv.T
                pl.BlockSpec((1, tn_), lambda i, j, k: (0, j)),     # su row
                pl.BlockSpec((1, tn_), lambda i, j, k: (0, j)),     # sv row
                pl.BlockSpec((tn_, C), lambda i, j, k: (j, 0)),     # Wo.T (const over k)
            ],
            out_specs=pl.BlockSpec((tm_, C), lambda i, j, k: (i, 0)),
            scratch_shapes=[pltpu.VMEM((tm_, tn_), jnp.float32),    # u accumulator
                            pltpu.VMEM((tm_, tn_), jnp.float32),    # v accumulator
                            pltpu.VMEM((tm_, C), jnp.float32)],     # y accumulator
        ),
        compiler_params=pltpu.CompilerParams(
            dimension_semantics=("parallel", "arbitrary", "arbitrary"),
            vmem_limit_bytes=48 * 1024 * 1024),
        cost_estimate=cost,
    )(x2d, wu_t, wv_t, su_row, sv_row, wo_t)

    return y[:M].reshape(B, T, C)


# --------------------------- pure-JAX reference ------------------------------ #

def reference_forward(x, Wu, Wv, Wo, su, sv, *,
                      restore_scale_su=1.0, restore_scale_sv=1.0):
    dim = x.shape[-1]
    u = (x @ Wu.T) * (su * restore_scale_su)
    v = (x @ Wv.T) * (sv * restore_scale_sv) * dim ** 0.5
    h = u * (v * jax.nn.sigmoid(v))          # u * silu(v)
    y = h @ Wo.T
    nrm = jnp.sqrt(jnp.sum(y * y, axis=-1, keepdims=True))
    return y / jnp.maximum(nrm, 1e-12)


# ----------------------------------- main ------------------------------------ #

if __name__ == "__main__":
    B, T, DIM, HIDDEN = 2, 128, 256, 512     # M = 256 rows; every grid axis >1 step below

    key = jax.random.PRNGKey(0)
    kx, ku, kv, ko, ks1, ks2 = jax.random.split(key, 6)

    bound_in = 1.0 / math.sqrt(DIM)
    bound_h = 1.0 / math.sqrt(HIDDEN)
    Wu = jax.random.uniform(ku, (HIDDEN, DIM), jnp.float32, -bound_in, bound_in)
    Wv = jax.random.uniform(kv, (HIDDEN, DIM), jnp.float32, -bound_in, bound_in)
    Wo = jax.random.uniform(ko, (DIM, HIDDEN), jnp.float32, -bound_h, bound_h)
    su = jax.random.uniform(ks1, (HIDDEN,), jnp.float32, 0.5, 1.5)
    sv = jax.random.uniform(ks2, (HIDDEN,), jnp.float32, 0.5, 1.5)
    x = jax.random.normal(kx, (B, T, DIM), jnp.float32)

    ref = reference_forward(x, Wu, Wv, Wo, su, sv)

    # Default path: bf16 operands on the MXU, f32 accumulation/epilogue.
    # Tiles chosen so every grid axis has >1 step at these small shapes
    # (exercises the software pipeline); production sizes can use the defaults.
    params_bf16 = prepare_mlp_params(Wu, Wv, Wo, su, sv)       # hoisted weight prep
    out = mlp_forward(x, params_bf16, tm=128, tn=256, tk=128)
    out = jax.block_until_ready(out)
    assert out.shape == (B, T, DIM)
    assert jnp.allclose(out, ref, atol=3e-2, rtol=3e-2), "bf16 path mismatch vs reference"

    # f32 compute path: validates kernel structure against the reference tightly.
    params_f32 = prepare_mlp_params(Wu, Wv, Wo, su, sv, compute_dtype=jnp.float32)
    out32 = jax.block_until_ready(mlp_forward(x, params_f32, tm=128, tn=256, tk=128))
    assert jnp.allclose(out32, ref, atol=1e-2, rtol=1e-2), "f32 path mismatch vs reference"

    print("KERNEL_OK")
</pallas_src>

<mosaic_0001>
module attributes {stable_mosaic.version = 11 : i64} {
  func.func @_mlp_fused_kernel(%arg0: i32, %arg1: i32, %arg2: i32, %arg3: memref<128x128xbf16, #tpu.memory_space<vmem>>, %arg4: memref<128x256xbf16, #tpu.memory_space<vmem>>, %arg5: memref<128x256xbf16, #tpu.memory_space<vmem>>, %arg6: memref<1x256xf32, #tpu.memory_space<vmem>>, %arg7: memref<1x256xf32, #tpu.memory_space<vmem>>, %arg8: memref<256x256xbf16, #tpu.memory_space<vmem>>, %arg9: memref<128x256xf32, #tpu.memory_space<vmem>>, %arg10: memref<128x256xf32, #tpu.memory_space<vmem>>, %arg11: memref<128x256xf32, #tpu.memory_space<vmem>>, %arg12: memref<128x256xf32, #tpu.memory_space<vmem>>) attributes {dimension_semantics = [#tpu.dimension_semantics<parallel>, #tpu.dimension_semantics<arbitrary>, #tpu.dimension_semantics<arbitrary>], iteration_bounds = array<i64: 2, 2, 2>, scalar_prefetch = 0 : i64, scratch_operands = 3 : i64, tpu.core_type = #tpu.core_type<tc>, window_params = [{transform_indices = @transform_0, window_bounds = array<i64: 128, 128>}, {transform_indices = @transform_1, window_bounds = array<i64: 128, 256>}, {transform_indices = @transform_2, window_bounds = array<i64: 128, 256>}, {transform_indices = @transform_3, window_bounds = array<i64: 1, 256>}, {transform_indices = @transform_4, window_bounds = array<i64: 1, 256>}, {transform_indices = @transform_5, window_bounds = array<i64: 256, 256>}, {transform_indices = @transform_6, window_bounds = array<i64: 128, 256>}]} {
    %c0_i32 = arith.constant 0 : i32
    %0 = arith.cmpi eq, %arg1, %c0_i32 : i32
    %c0_i32_0 = arith.constant 0 : i32
    %1 = arith.cmpi eq, %arg2, %c0_i32_0 : i32
    %2 = arith.andi %0, %1 : i1
    %3 = arith.extui %2 : i1 to i32
    %c0_i32_1 = arith.constant 0 : i32
    %4 = arith.cmpi ne, %3, %c0_i32_1 : i32
    scf.if %4 {
      %cst_22 = arith.constant 0.000000e+00 : f32
      %27 = vector.broadcast %cst_22 : f32 to vector<128x256xf32>
      %c0_23 = arith.constant 0 : index
      %c0_24 = arith.constant 0 : index
      %28 = vector.load %arg12[%c0_23, %c0_24] : memref<128x256xf32, #tpu.memory_space<vmem>>, vector<128x256xf32>
      tpu.vector_store %arg12[%c0_23, %c0_24], %27 {strides = array<i32>} : memref<128x256xf32, #tpu.memory_space<vmem>>, vector<128x256xf32>,
    } else {
    }
    %c0_i32_2 = arith.constant 0 : i32
    %5 = arith.cmpi eq, %arg2, %c0_i32_2 : i32
    %6 = arith.extui %5 : i1 to i32
    %c0_i32_3 = arith.constant 0 : i32
    %7 = arith.cmpi ne, %6, %c0_i32_3 : i32
    scf.if %7 {
      %cst_22 = arith.constant 0.000000e+00 : f32
      %27 = vector.broadcast %cst_22 : f32 to vector<128x256xf32>
      %c0_23 = arith.constant 0 : index
      %c0_24 = arith.constant 0 : index
      %28 = vector.load %arg10[%c0_23, %c0_24] : memref<128x256xf32, #tpu.memory_space<vmem>>, vector<128x256xf32>
      tpu.vector_store %arg10[%c0_23, %c0_24], %27 {strides = array<i32>} : memref<128x256xf32, #tpu.memory_space<vmem>>, vector<128x256xf32>,
      %cst_25 = arith.constant 0.000000e+00 : f32
      %29 = vector.broadcast %cst_25 : f32 to vector<128x256xf32>
      %c0_26 = arith.constant 0 : index
      %c0_27 = arith.constant 0 : index
      %30 = vector.load %arg11[%c0_26, %c0_27] : memref<128x256xf32, #tpu.memory_space<vmem>>, vector<128x256xf32>
      tpu.vector_store %arg11[%c0_26, %c0_27], %29 {strides = array<i32>} : memref<128x256xf32, #tpu.memory_space<vmem>>, vector<128x256xf32>,
    } else {
    }
    %c0 = arith.constant 0 : index
    %c0_4 = arith.constant 0 : index
    %8 = vector.load %arg3[%c0, %c0_4] : memref<128x128xbf16, #tpu.memory_space<vmem>>, vector<128x128xbf16>
    %c0_5 = arith.constant 0 : index
    %c0_6 = arith.constant 0 : index
    %9 = vector.load %arg10[%c0_5, %c0_6] : memref<128x256xf32, #tpu.memory_space<vmem>>, vector<128x256xf32>
    %c0_7 = arith.constant 0 : index
    %c0_8 = arith.constant 0 : index
    %10 = vector.load %arg4[%c0_7, %c0_8] : memref<128x256xbf16, #tpu.memory_space<vmem>>, vector<128x256xbf16>
    %cst = arith.constant dense<0.000000e+00> : vector<128x256xf32>
    %11 = tpu.matmul %8, %10, %cst {dimension_numbers = #tpu.dot_dimension_numbers<[1], [0], [0], [1], [0, 0, 1, 1], [], []>} : vector<128x128xbf16>, vector<128x256xbf16>, vector<128x256xf32> -> vector<128x256xf32>
    %12 = arith.addf %9, %11 : vector<128x256xf32>
    %c0_9 = arith.constant 0 : index
    %c0_10 = arith.constant 0 : index
    %13 = vector.load %arg10[%c0_9, %c0_10] : memref<128x256xf32, #tpu.memory_space<vmem>>, vector<128x256xf32>
    tpu.vector_store %arg10[%c0_9, %c0_10], %12 {strides = array<i32>} : memref<128x256xf32, #tpu.memory_space<vmem>>, vector<128x256xf32>,
    %c0_11 = arith.constant 0 : index
    %c0_12 = arith.constant 0 : index
    %14 = vector.load %arg11[%c0_11, %c0_12] : memref<128x256xf32, #tpu.memory_space<vmem>>, vector<128x256xf32>
    %c0_13 = arith.constant 0 : index
    %c0_14 = arith.constant 0 : index
    %15 = vector.load %arg5[%c0_13, %c0_14] : memref<128x256xbf16, #tpu.memory_space<vmem>>, vector<128x256xbf16>
    %cst_15 = arith.constant dense<0.000000e+00> : vector<128x256xf32>
    %16 = tpu.matmul %8, %15, %cst_15 {dimension_numbers = #tpu.dot_dimension_numbers<[1], [0], [0], [1], [0, 0, 1, 1], [], []>} : vector<128x128xbf16>, vector<128x256xbf16>, vector<128x256xf32> -> vector<128x256xf32>
    %17 = arith.addf %14, %16 : vector<128x256xf32>
    %c0_16 = arith.constant 0 : index
    %c0_17 = arith.constant 0 : index
    %18 = vector.load %arg11[%c0_16, %c0_17] : memref<128x256xf32, #tpu.memory_space<vmem>>, vector<128x256xf32>
    tpu.vector_store %arg11[%c0_16, %c0_17], %17 {strides = array<i32>} : memref<128x256xf32, #tpu.memory_space<vmem>>, vector<128x256xf32>,
    %c1_i32 = arith.constant 1 : i32
    %19 = arith.cmpi eq, %arg2, %c1_i32 : i32
    %20 = arith.extui %19 : i1 to i32
    %c0_i32_18 = arith.constant 0 : i32
    %21 = arith.cmpi ne, %20, %c0_i32_18 : i32
    scf.if %21 {
      %c0_22 = arith.constant 0 : index
      %c0_23 = arith.constant 0 : index
      %27 = vector.load %arg10[%c0_22, %c0_23] : memref<128x256xf32, #tpu.memory_space<vmem>>, vector<128x256xf32>
      %c0_24 = arith.constant 0 : index
      %c0_25 = arith.constant 0 : index
      %28 = vector.load %arg6[%c0_24, %c0_25] : memref<1x256xf32, #tpu.memory_space<vmem>>, vector<1x256xf32>
      %29 = vector.broadcast %28 : vector<1x256xf32> to vector<128x256xf32>
      %30 = arith.mulf %27, %29 : vector<128x256xf32>
      %c0_26 = arith.constant 0 : index
      %c0_27 = arith.constant 0 : index
      %31 = vector.load %arg11[%c0_26, %c0_27] : memref<128x256xf32, #tpu.memory_space<vmem>>, vector<128x256xf32>
      %c0_28 = arith.constant 0 : index
      %c0_29 = arith.constant 0 : index
      %32 = vector.load %arg7[%c0_28, %c0_29] : memref<1x256xf32, #tpu.memory_space<vmem>>, vector<1x256xf32>
      %33 = vector.broadcast %32 : vector<1x256xf32> to vector<128x256xf32>
      %34 = arith.mulf %31, %33 : vector<128x256xf32>
      %cst_30 = arith.constant 0.000000e+00 : f32
      %35 = vector.broadcast %cst_30 : f32 to vector<128x256xf32>
      %36 = arith.subf %35, %34 : vector<128x256xf32>
      %37 = math.exp %36 : vector<128x256xf32>
      %cst_31 = arith.constant 1.000000e+00 : f32
      %38 = vector.broadcast %cst_31 : f32 to vector<128x256xf32>
      %39 = arith.addf %38, %37 : vector<128x256xf32>
      %40 = tpu.reciprocal %39 {approx = true} : vector<128x256xf32> -> vector<128x256xf32>
      %41 = arith.mulf %34, %40 : vector<128x256xf32>
      %42 = arith.mulf %30, %41 : vector<128x256xf32>
      %43 = arith.truncf %42 : vector<128x256xf32> to vector<128x256xbf16>
      %c0_32 = arith.constant 0 : index
      %c0_33 = arith.constant 0 : index
      %44 = vector.load %arg12[%c0_32, %c0_33] : memref<128x256xf32, #tpu.memory_space<vmem>>, vector<128x256xf32>
      %c0_34 = arith.constant 0 : index
      %c0_35 = arith.constant 0 : index
      %45 = vector.load %arg8[%c0_34, %c0_35] : memref<256x256xbf16, #tpu.memory_space<vmem>>, vector<256x256xbf16>
      %cst_36 = arith.constant dense<0.000000e+00> : vector<128x256xf32>
      %46 = tpu.matmul %43, %45, %cst_36 {dimension_numbers = #tpu.dot_dimension_numbers<[1], [0], [0], [1], [0, 0, 1, 1], [], []>} : vector<128x256xbf16>, vector<256x256xbf16>, vector<128x256xf32> -> vector<128x256xf32>
      %47 = arith.addf %44, %46 : vector<128x256xf32>
      %c0_37 = arith.constant 0 : index
      %c0_38 = arith.constant 0 : index
      %48 = vector.load %arg12[%c0_37, %c0_38] : memref<128x256xf32, #tpu.memory_space<vmem>>, vector<128x256xf32>
      tpu.vector_store %arg12[%c0_37, %c0_38], %47 {strides = array<i32>} : memref<128x256xf32, #tpu.memory_space<vmem>>, vector<128x256xf32>,
    } else {
    }
    %c1_i32_19 = arith.constant 1 : i32
    %22 = arith.cmpi eq, %arg1, %c1_i32_19 : i32
    %c1_i32_20 = arith.constant 1 : i32
    %23 = arith.cmpi eq, %arg2, %c1_i32_20 : i32
    %24 = arith.andi %22, %23 : i1
    %25 = arith.extui %24 : i1 to i32
    %c0_i32_21 = arith.constant 0 : i32
    %26 = arith.cmpi ne, %25, %c0_i32_21 : i32
    scf.if %26 {
      %c0_22 = arith.constant 0 : index
      %c0_23 = arith.constant 0 : index
      %27 = vector.load %arg12[%c0_22, %c0_23] : memref<128x256xf32, #tpu.memory_space<vmem>>, vector<128x256xf32>
      %28 = arith.mulf %27, %27 : vector<128x256xf32>
      %cst_24 = arith.constant dense<0.000000e+00> : vector<128xf32>
      %29 = vector.multi_reduction <add>, %28, %cst_24 [1] : vector<128x256xf32> to vector<128xf32>
      %30 = vector.shape_cast %29 : vector<128xf32> to vector<128x1xf32>
      %cst_25 = arith.constant 1.000000e-24 : f32
      %31 = vector.broadcast %cst_25 : f32 to vector<128x1xf32>
      %32 = arith.maximumf %30, %31 : vector<128x1xf32>
      %33 = math.rsqrt %32 : vector<128x1xf32>
      %34 = vector.broadcast %33 : vector<128x1xf32> to vector<128x256xf32>
      %35 = arith.mulf %27, %34 : vector<128x256xf32>
      %c0_26 = arith.constant 0 : index
      %c0_27 = arith.constant 0 : index
      %36 = vector.load %arg9[%c0_26, %c0_27] : memref<128x256xf32, #tpu.memory_space<vmem>>, vector<128x256xf32>
      tpu.vector_store %arg9[%c0_26, %c0_27], %35 {strides = array<i32>} : memref<128x256xf32, #tpu.memory_space<vmem>>, vector<128x256xf32>,
    } else {
    }
    return
  }
  func.func @transform_0(%arg0: i32, %arg1: i32, %arg2: i32) -> (i32, i32) {
    %c0_i32 = arith.constant 0 : i32
    return %arg0, %arg2 : i32, i32
  }
  func.func @transform_1(%arg0: i32, %arg1: i32, %arg2: i32) -> (i32, i32) {
    %c0_i32 = arith.constant 0 : i32
    return %arg2, %arg1 : i32, i32
  }
  func.func @transform_2(%arg0: i32, %arg1: i32, %arg2: i32) -> (i32, i32) {
    %c0_i32 = arith.constant 0 : i32
    return %arg2, %arg1 : i32, i32
  }
  func.func @transform_3(%arg0: i32, %arg1: i32, %arg2: i32) -> (i32, i32) {
    %c0_i32 = arith.constant 0 : i32
    %c0_i32_0 = arith.constant 0 : i32
    return %c0_i32, %arg1 : i32, i32
  }
  func.func @transform_4(%arg0: i32, %arg1: i32, %arg2: i32) -> (i32, i32) {
    %c0_i32 = arith.constant 0 : i32
    %c0_i32_0 = arith.constant 0 : i32
    return %c0_i32, %arg1 : i32, i32
  }
  func.func @transform_5(%arg0: i32, %arg1: i32, %arg2: i32) -> (i32, i32) {
    %c0_i32 = arith.constant 0 : i32
    %c0_i32_0 = arith.constant 0 : i32
    return %arg1, %c0_i32 : i32, i32
  }
  func.func @transform_6(%arg0: i32, %arg1: i32, %arg2: i32) -> (i32, i32) {
    %c0_i32 = arith.constant 0 : i32
    %c0_i32_0 = arith.constant 0 : i32
    return %arg0, %c0_i32 : i32, i32
  }
}

</mosaic_0001>

<llo_original>
// kernel: tpu_custom_call.1
$region0: #{tpu_custom_call.1}
  #allocation0 [shape = 'u32[]', space=smem, size = 0x4, offset = 0x4, fixed_abs, tag = 'smem constant byte address 0x4 - core index']
  #allocation1 [shape = 'u32[144,128]{1,0:T(1,128)}', space=vmem, size = 0x12000, scoped, tag = 'internal scratch']
  #allocation2 [shape = 'f32[128,256]{1,0:T(8,128)}', space=vmem, size = 0x20000, scoped, tag = 'scratch operand']
  #allocation3 [shape = 'f32[128,256]{1,0:T(8,128)}', space=vmem, size = 0x20000, scoped, tag = 'scratch operand']
  #allocation4 [shape = 'f32[128,256]{1,0:T(8,128)}', space=vmem, size = 0x20000, scoped, tag = 'scratch operand']
  %s0 = inlined_call_operand.hbm [shape: bf16[256,256], index: 0, kind: input, shape index: {}]
  %s1 = inlined_call_operand.hbm [shape: bf16[256,512], index: 1, kind: input, shape index: {}]
  %s2 = inlined_call_operand.hbm [shape: bf16[256,512], index: 2, kind: input, shape index: {}]
  %s3 = inlined_call_operand.vmem [shape: f32[1,512], index: 3, kind: input, shape index: {}]
  %s4 = inlined_call_operand.vmem [shape: f32[1,512], index: 4, kind: input, shape index: {}]
  %s5 = inlined_call_operand.hbm [shape: bf16[512,256], index: 5, kind: input, shape index: {}]
  %s6 = inlined_call_operand.hbm [shape: f32[256,256], index: 6, kind: output, shape index: {}]
  %s7 = sld [smem:[#allocation0]]
  $region89: #{tpu_custom_call.1} parent=0
    _
  %s9 = ssub.s32 1, %s7
  %s10 = scalar_select 0, %s9, %s7
  $region1: #{tpu_custom_call.1} parent=0
    #allocation5 [shape = 'u8[65536]{0}', space=vmem, size = 0x10000, scoped, tag = 'input window, operand 0']
    #allocation6 [shape = 's32[2]{0}', space=sflag, size = 0x8, scoped, tag = 'scoped memory for tpu_custom_call.1']
    #allocation7 [shape = 's32[2]{0}', space=sflag, size = 0x8, scoped, tag = 'scoped memory for tpu_custom_call.1']
    #allocation8 [shape = 'u8[131072]{0}', space=vmem, size = 0x20000, scoped, tag = 'input window, operand 1']
    #allocation9 [shape = 's32[2]{0}', space=sflag, size = 0x8, scoped, tag = 'scoped memory for tpu_custom_call.1']
    #allocation10 [shape = 'u8[131072]{0}', space=vmem, size = 0x20000, scoped, tag = 'input window, operand 2']
    #allocation11 [shape = 'u8[262144]{0}', space=vmem, size = 0x40000, scoped, tag = 'input window, operand 5']
    #allocation12 [shape = 's32[2]{0}', space=sflag, size = 0x8, scoped, tag = 'scoped memory for tpu_custom_call.1']
    #allocation13 [shape = 'u8[262144]{0}', space=vmem, size = 0x40000, scoped, tag = 'output window, operand 0']
    %11 = vsyncpa [#allocation6], 0
    %s12 = scalar_lea.sflag [#allocation6], 1
    %13 = vsyncpa %s12, 0
    %14 = vsyncpa [#allocation9], 0
    %s15 = scalar_lea.sflag [#allocation9], 1
    %16 = vsyncpa %s15, 0
    %17 = vsyncpa [#allocation12], 0
    %s18 = scalar_lea.sflag [#allocation12], 1
    %19 = vsyncpa %s18, 0
    %20 = vsyncpa [#allocation7], 0
    %s21 = scalar_lea.sflag [#allocation7], 1
    %22 = vsyncpa %s21, 0
    loop: start=0, step=1, limit=10
    $region2: #{tpu_custom_call.1} parent=1 // loop_pre_header
      _
    $region3: #{tpu_custom_call.1} parent=1 // loop_header
      %s24 = sphi 0, %s28
      %p25 = scmp.ge.s32.totalorder %s24, 10
      %s31 = sphi 0, %s50
      %s32 = sphi 0, %s46
      %s33 = sphi 0, %s42
      %s34 = sphi 0, %s31
      %s35 = sphi 0, %s32
      %s36 = sphi 0, %s33
      %s37 = sphi 0, %s34
      %s38 = sphi 0, %s35
      %s39 = sphi 0, %s36
      %s55 = sphi 0, %s57
      %s58 = sphi 0, %s55
      %s59 = sphi 0, %s58
      %s75 = sphi 0, %s59
      %s83 = sphi 0, %s85
      %s86 = sphi 0, %s83
      %s87 = sphi 0, %s86
      %s103 = sphi 0, %s87
      %s111 = sphi 0, %s113
      %s114 = sphi 0, %s111
      %s115 = sphi 0, %s114
      %s131 = sphi 0, %s115
      %s137 = sphi 0, %s139
      %s140 = sphi 0, %s137
      %s141 = sphi 0, %s140
      %s157 = sphi 0, %s141
      %s163 = sphi 0, %s165
      %s166 = sphi 0, %s163
      %s167 = sphi 0, %s166
      %s183 = sphi 0, %s167
      %s189 = sphi 0, %s191
      %s192 = sphi 0, %s189
      %s193 = sphi 0, %s192
      %s209 = sphi 0, %s193
      %s215 = sphi 0, %s217
      %s218 = sphi 0, %s215
      %s219 = sphi 0, %s218
      %s235 = sphi 0, %s219
    $region4: #{tpu_custom_call.1} parent=1 // loop_header_branch
      %27 = sbr.rel (%p25) target = $region8
    $region5: #{tpu_custom_call.1} parent=1 // loop_body
      %s29 = ssub.s32 %s24, 1
      %s30 = ssub.s32 %s24, 2
      %s40 = sadd.s32 1, %s33
      %p41 = scmp.ge.s32.totalorder %s40, 2
      %s42 = scalar_select %p41, 0, %s40
      %s43 = sadd.s32 1, %s32
      %s44 = scalar_select %p41, %s43, %s32
      %p45 = scmp.ge.s32.totalorder %s44, 2
      %s46 = scalar_select %p45, 0, %s44
      %s47 = sadd.s32 1, %s31
      %s48 = scalar_select %p45, %s47, %s31
      %p49 = scmp.ge.s32.totalorder %s48, 2
      %s50 = scalar_select %p49, 0, %s48
      %s51 = ssub.s32 %s31, %s50
      %s52 = ssub.s32 %s33, %s42
      %s53 = sor.u32 %s51, %s52
      %p54 = scmp.eq.s32.totalorder %s53, 0
      %s56 = sadd.s32 %s55, 1
      %s57 = scalar_select %p54, %s55, %s56
      %p60 = pneg %p54
      %p61 = scmp.eq.s32.totalorder %s24, 7
      %p62 = por %p60, %p61
      %p63 = scmp.ne.s32.totalorder %s55, %s58
      %p64 = scmp.eq.s32.totalorder %s24, 0
      %p65 = por %p63, %p64
      %p66 = scmp.ne.s32.totalorder %s55, %s58
      %p67 = scmp.eq.s32.totalorder %s29, 7
      %p68 = por %p66, %p67
      %p69 = scmp.ne.s32.totalorder %s58, %s59
      %p70 = scmp.eq.s32.totalorder %s29, 0
      %p71 = por %p69, %p70
      %p72 = scmp.ne.s32.totalorder %s58, %s59
      %p73 = scmp.eq.s32.totalorder %s30, 7
      %p74 = por %p72, %p73
      %p76 = scmp.ne.s32.totalorder %s59, %s75
      %p77 = scmp.eq.s32.totalorder %s30, 0
      %p78 = por %p76, %p77
      %s79 = ssub.s32 %s33, %s42
      %s80 = ssub.s32 %s32, %s46
      %s81 = sor.u32 %s79, %s80
      %p82 = scmp.eq.s32.totalorder %s81, 0
      %s84 = sadd.s32 %s83, 1
      %s85 = scalar_select %p82, %s83, %s84
      %p88 = pneg %p82
      %p89 = scmp.eq.s32.totalorder %s24, 7
      %p90 = por %p88, %p89
      %p91 = scmp.ne.s32.totalorder %s83, %s86
      %p92 = scmp.eq.s32.totalorder %s24, 0
      %p93 = por %p91, %p92
      %p94 = scmp.ne.s32.totalorder %s83, %s86
      %p95 = scmp.eq.s32.totalorder %s29, 7
      %p96 = por %p94, %p95
      %p97 = scmp.ne.s32.totalorder %s86, %s87
      %p98 = scmp.eq.s32.totalorder %s29, 0
      %p99 = por %p97, %p98
      %p100 = scmp.ne.s32.totalorder %s86, %s87
      %p101 = scmp.eq.s32.totalorder %s30, 7
      %p102 = por %p100, %p101
      %p104 = scmp.ne.s32.totalorder %s87, %s103
      %p105 = scmp.eq.s32.totalorder %s30, 0
      %p106 = por %p104, %p105
      %s107 = ssub.s32 %s33, %s42
      %s108 = ssub.s32 %s32, %s46
      %s109 = sor.u32 %s107, %s108
      %p110 = scmp.eq.s32.totalorder %s109, 0
      %s112 = sadd.s32 %s111, 1
      %s113 = scalar_select %p110, %s111, %s112
      %p116 = pneg %p110
      %p117 = scmp.eq.s32.totalorder %s24, 7
      %p118 = por %p116, %p117
      %p119 = scmp.ne.s32.totalorder %s111, %s114
      %p120 = scmp.eq.s32.totalorder %s24, 0
      %p121 = por %p119, %p120
      %p122 = scmp.ne.s32.totalorder %s111, %s114
      %p123 = scmp.eq.s32.totalorder %s29, 7
      %p124 = por %p122, %p123
      %p125 = scmp.ne.s32.totalorder %s114, %s115
      %p126 = scmp.eq.s32.totalorder %s29, 0
      %p127 = por %p125, %p126
      %p128 = scmp.ne.s32.totalorder %s114, %s115
      %p129 = scmp.eq.s32.totalorder %s30, 7
      %p130 = por %p128, %p129
      %p132 = scmp.ne.s32.totalorder %s115, %s131
      %p133 = scmp.eq.s32.totalorder %s30, 0
      %p134 = por %p132, %p133
      %s135 = ssub.s32 %s32, %s46
      %p136 = scmp.eq.s32.totalorder %s135, 0
      %s138 = sadd.s32 %s137, 1
      %s139 = scalar_select %p136, %s137, %s138
      %p142 = pneg %p136
      %p143 = scmp.eq.s32.totalorder %s24, 7
      %p144 = por %p142, %p143
      %p145 = scmp.ne.s32.totalorder %s137, %s140
      %p146 = scmp.eq.s32.totalorder %s24, 0
      %p147 = por %p145, %p146
      %p148 = scmp.ne.s32.totalorder %s137, %s140
      %p149 = scmp.eq.s32.totalorder %s29, 7
      %p150 = por %p148, %p149
      %p151 = scmp.ne.s32.totalorder %s140, %s141
      %p152 = scmp.eq.s32.totalorder %s29, 0
      %p153 = por %p151, %p152
      %p154 = scmp.ne.s32.totalorder %s140, %s141
      %p155 = scmp.eq.s32.totalorder %s30, 7
      %p156 = por %p154, %p155
      %p158 = scmp.ne.s32.totalorder %s141, %s157
      %p159 = scmp.eq.s32.totalorder %s30, 0
      %p160 = por %p158, %p159
      %s161 = ssub.s32 %s32, %s46
      %p162 = scmp.eq.s32.totalorder %s161, 0
      %s164 = sadd.s32 %s163, 1
      %s165 = scalar_select %p162, %s163, %s164
      %p168 = pneg %p162
      %p169 = scmp.eq.s32.totalorder %s24, 7
      %p170 = por %p168, %p169
      %p171 = scmp.ne.s32.totalorder %s163, %s166
      %p172 = scmp.eq.s32.totalorder %s24, 0
      %p173 = por %p171, %p172
      %p174 = scmp.ne.s32.totalorder %s163, %s166
      %p175 = scmp.eq.s32.totalorder %s29, 7
      %p176 = por %p174, %p175
      %p177 = scmp.ne.s32.totalorder %s166, %s167
      %p178 = scmp.eq.s32.totalorder %s29, 0
      %p179 = por %p177, %p178
      %p180 = scmp.ne.s32.totalorder %s166, %s167
      %p181 = scmp.eq.s32.totalorder %s30, 7
      %p182 = por %p180, %p181
      %p184 = scmp.ne.s32.totalorder %s167, %s183
      %p185 = scmp.eq.s32.totalorder %s30, 0
      %p186 = por %p184, %p185
      %s187 = ssub.s32 %s32, %s46
      %p188 = scmp.eq.s32.totalorder %s187, 0
      %s190 = sadd.s32 %s189, 1
      %s191 = scalar_select %p188, %s189, %s190
      %p194 = pneg %p188
      %p195 = scmp.eq.s32.totalorder %s24, 7
      %p196 = por %p194, %p195
      %p197 = scmp.ne.s32.totalorder %s189, %s192
      %p198 = scmp.eq.s32.totalorder %s24, 0
      %p199 = por %p197, %p198
      %p200 = scmp.ne.s32.totalorder %s189, %s192
      %p201 = scmp.eq.s32.totalorder %s29, 7
      %p202 = por %p200, %p201
      %p203 = scmp.ne.s32.totalorder %s192, %s193
      %p204 = scmp.eq.s32.totalorder %s29, 0
      %p205 = por %p203, %p204
      %p206 = scmp.ne.s32.totalorder %s192, %s193
      %p207 = scmp.eq.s32.totalorder %s30, 7
      %p208 = por %p206, %p207
      %p210 = scmp.ne.s32.totalorder %s193, %s209
      %p211 = scmp.eq.s32.totalorder %s30, 0
      %p212 = por %p210, %p211
      %s213 = ssub.s32 %s31, %s50
      %p214 = scmp.eq.s32.totalorder %s213, 0
      %s216 = sadd.s32 %s215, 1
      %s217 = scalar_select %p214, %s215, %s216
      %p220 = pneg %p214
      %p221 = scmp.eq.s32.totalorder %s24, 7
      %p222 = por %p220, %p221
      %p223 = scmp.ne.s32.totalorder %s215, %s218
      %p224 = scmp.eq.s32.totalorder %s24, 0
      %p225 = por %p223, %p224
      %p226 = scmp.ne.s32.totalorder %s215, %s218
      %p227 = scmp.eq.s32.totalorder %s29, 7
      %p228 = por %p226, %p227
      %p229 = scmp.ne.s32.totalorder %s218, %s219
      %p230 = scmp.eq.s32.totalorder %s29, 0
      %p231 = por %p229, %p230
      %p232 = scmp.ne.s32.totalorder %s218, %s219
      %p233 = scmp.eq.s32.totalorder %s30, 7
      %p234 = por %p232, %p233
      %p236 = scmp.ne.s32.totalorder %s219, %s235
      %p237 = scmp.eq.s32.totalorder %s30, 0
      %p238 = por %p236, %p237
      %p239 = scmp.le.s32.totalorder 1, %s24
      %p240 = scmp.lt.s32.totalorder %s24, 9
      %p241 = pnand %p239, %p240
      %p242 = pneg %p241
      // Predicated region
      $region9: #{tpu_custom_call.1} parent=5 // pred_check
        _
      $region10: #{tpu_custom_call.1} parent=5 // pred_check_branch
        %244 = sbr.rel (%p241) target = $region12
      $region11: #{tpu_custom_call.1} parent=5 // pred_region
        %s245 = ssub.s32 %s24, 1
      $region12: #{tpu_custom_call.1} parent=5 // pred_fallthru
        _
      %p246 = scmp.lt.s32.totalorder %s24, 8
      // Predicated region
      $region13: #{tpu_custom_call.1} parent=5 // pred_check
        %p247 = pneg %p246
      $region14: #{tpu_custom_call.1} parent=5 // pred_check_branch
        %249 = sbr.rel (%p247) target = $region16
      $region15: #{tpu_custom_call.1} parent=5 // pred_region
        // Predicated region
        $region17: #{tpu_custom_call.1} parent=15 // pred_check
          %p250 = pneg %p65
        $region18: #{tpu_custom_call.1} parent=15 // pred_check_branch
          %252 = sbr.rel (%p250) target = $region20
        $region19: #{tpu_custom_call.1} parent=15 // pred_region
          %s253 = sand.u32 %s55, 1
          %s254 = scalar_lea.sflag [#allocation6], %s253
          %s255 = sand.u32 %s55, 1
          %s256 = smul.addr %s255, 64
          %s257 = scalar_lea.vmem [#allocation5], %s256
          %s258 = smul.u32 16, %s31
          %s260 = ssub.s32 1024, 1024
          %261 = vsyncadd %s254, %s260
          %s262 = smul.addr %s258, 2
          %s263 = sadd.s32 %s33, %s262
          %s264 = smul.addr %s263, 64
          %s265 = scalar_lea.hbm %s0, %s264
          %s266 = sshll.u32 %s257, 4
          %s267 = int_to_ptr.vmem [resolvable:$true] %s266
          %272 = dma.hbm_to_vmem [thread:$0]  %s265, 1024, %s267, %s254, 128, 64, 4
        $region20: #{tpu_custom_call.1} parent=15 // pred_fallthru
          _
        // Predicated region
        $region21: #{tpu_custom_call.1} parent=15 // pred_check
          %p273 = pneg %p93
        $region22: #{tpu_custom_call.1} parent=15 // pred_check_branch
          %275 = sbr.rel (%p273) target = $region24
        $region23: #{tpu_custom_call.1} parent=15 // pred_region
          %s276 = sand.u32 %s24, 1
          %s277 = scalar_lea.sflag [#allocation9], %s276
          %s278 = sand.u32 %s83, 1
          %s279 = smul.addr %s278, 128
          %s280 = scalar_lea.vmem [#allocation8], %s279
          %s281 = smul.u32 16, %s33
          %s282 = smul.u32 2, %s32
          %s284 = ssub.s32 2048, 2048
          %285 = vsyncadd %s277, %s284
          %s286 = smul.addr %s281, 4
          %s287 = sadd.s32 %s282, %s286
          %s288 = smul.addr %s287, 64
          %s289 = scalar_lea.hbm %s1, %s288
          %s290 = sshll.u32 %s280, 4
          %s291 = int_to_ptr.vmem [resolvable:$true] %s290
          %296 = dma.hbm_to_vmem [thread:$0]  %s289, 2048, %s291, %s277, 256, 128, 8
        $region24: #{tpu_custom_call.1} parent=15 // pred_fallthru
          _
        // Predicated region
        $region25: #{tpu_custom_call.1} parent=15 // pred_check
          %p297 = pneg %p121
        $region26: #{tpu_custom_call.1} parent=15 // pred_check_branch
          %299 = sbr.rel (%p297) target = $region28
        $region27: #{tpu_custom_call.1} parent=15 // pred_region
          %s300 = sand.u32 %s24, 1
          %s301 = scalar_lea.sflag [#allocation9], %s300
          %s302 = sand.u32 %s111, 1
          %s303 = smul.addr %s302, 128
          %s304 = scalar_lea.vmem [#allocation10], %s303
          %s305 = smul.u32 16, %s33
          %s306 = smul.u32 2, %s32
          %s308 = ssub.s32 2048, 2048
          %309 = vsyncadd %s301, %s308
          %s310 = smul.addr %s305, 4
          %s311 = sadd.s32 %s306, %s310
          %s312 = smul.addr %s311, 64
          %s313 = scalar_lea.hbm %s2, %s312
          %s314 = sshll.u32 %s304, 4
          %s315 = int_to_ptr.vmem [resolvable:$true] %s314
          %320 = dma.hbm_to_vmem [thread:$0]  %s313, 2048, %s315, %s301, 256, 128, 8
        $region28: #{tpu_custom_call.1} parent=15 // pred_fallthru
          _
        // Predicated region
        $region29: #{tpu_custom_call.1} parent=15 // pred_check
          %p321 = pneg %p147
        $region30: #{tpu_custom_call.1} parent=15 // pred_check_branch
          %323 = sbr.rel (%p321) target = $region32
        $region31: #{tpu_custom_call.1} parent=15 // pred_region
          %s324 = smul.u32 2, %s32
          %p325 = scmp.lt.s32.totalorder %s324, 3
          %s326 = scalar_select %p325, %s324, 3
          %s327 = scalar_lea.vmem %s3, %s326
          %s328 = smul.u32 2, %s32
        $region32: #{tpu_custom_call.1} parent=15 // pred_fallthru
          _
        // Predicated region
        $region33: #{tpu_custom_call.1} parent=15 // pred_check
          %p329 = pneg %p173
        $region34: #{tpu_custom_call.1} parent=15 // pred_check_branch
          %331 = sbr.rel (%p329) target = $region36
        $region35: #{tpu_custom_call.1} parent=15 // pred_region
          %s332 = smul.u32 2, %s32
          %p333 = scmp.lt.s32.totalorder %s332, 3
          %s334 = scalar_select %p333, %s332, 3
          %s335 = scalar_lea.vmem %s4, %s334
          %s336 = smul.u32 2, %s32
        $region36: #{tpu_custom_call.1} parent=15 // pred_fallthru
          _
        // Predicated region
        $region37: #{tpu_custom_call.1} parent=15 // pred_check
          %p337 = pneg %p199
        $region38: #{tpu_custom_call.1} parent=15 // pred_check_branch
          %339 = sbr.rel (%p337) target = $region40
        $region39: #{tpu_custom_call.1} parent=15 // pred_region
          %s340 = sand.u32 %s189, 1
          %s341 = scalar_lea.sflag [#allocation12], %s340
          %s342 = sand.u32 %s189, 1
          %s343 = smul.addr %s342, 256
          %s344 = scalar_lea.vmem [#allocation11], %s343
          %s345 = smul.u32 32, %s32
          %s347 = ssub.s32 4096, 4096
          %348 = vsyncadd %s341, %s347
          %s349 = smul.addr %s345, 2
          %s350 = smul.addr %s349, 64
          %s351 = scalar_lea.hbm %s5, %s350
          %s352 = sshll.u32 %s344, 4
          %s353 = int_to_ptr.vmem [resolvable:$true] %s352
          %358 = dma.hbm_to_vmem [thread:$0]  %s351, 4096, %s353, %s341, 128, 128, 8
        $region40: #{tpu_custom_call.1} parent=15 // pred_fallthru
          _
      $region16: #{tpu_custom_call.1} parent=5 // pred_fallthru
        _
      %p359 = scmp.le.s32.totalorder 1, %s24
      %p360 = scmp.lt.s32.totalorder %s24, 9
      %p361 = pnand %p359, %p360
      %p362 = pneg %p361
      // Predicated region
      $region41: #{tpu_custom_call.1} parent=5 // pred_check
        _
      $region42: #{tpu_custom_call.1} parent=5 // pred_check_branch
        %364 = sbr.rel (%p361) target = $region44
      $region43: #{tpu_custom_call.1} parent=5 // pred_region
        %s365 = ssub.s32 %s24, 1
        %s366 = sand.u32 %s58, 1
        %s367 = scalar_lea.sflag [#allocation6], %s366
        %s368 = sand.u32 %s58, 1
        %s369 = smul.addr %s368, 64
        %s370 = scalar_lea.vmem [#allocation5], %s369
        // Predicated region
        $region45: #{tpu_custom_call.1} parent=43 // pred_check
          %p371 = pneg %p71
        $region46: #{tpu_custom_call.1} parent=43 // pred_check_branch
          %373 = sbr.rel (%p371) target = $region48
        $region47: #{tpu_custom_call.1} parent=43 // pred_region
          %374 = dma.done %s367, 1024
        $region48: #{tpu_custom_call.1} parent=43 // pred_fallthru
          _
        %s375 = sand.u32 %s29, 1
        %s376 = scalar_lea.sflag [#allocation9], %s375
        %s377 = sand.u32 %s86, 1
        %s378 = smul.addr %s377, 128
        %s379 = scalar_lea.vmem [#allocation8], %s378
        // Predicated region
        $region49: #{tpu_custom_call.1} parent=43 // pred_check
          %p380 = pneg %p99
        $region50: #{tpu_custom_call.1} parent=43 // pred_check_branch
          %382 = sbr.rel (%p380) target = $region52
        $region51: #{tpu_custom_call.1} parent=43 // pred_region
          %383 = dma.done %s376, 2048
        $region52: #{tpu_custom_call.1} parent=43 // pred_fallthru
          _
        %s384 = sand.u32 %s29, 1
        %s385 = scalar_lea.sflag [#allocation9], %s384
        %s386 = sand.u32 %s114, 1
        %s387 = smul.addr %s386, 128
        %s388 = scalar_lea.vmem [#allocation10], %s387
        // Predicated region
        $region53: #{tpu_custom_call.1} parent=43 // pred_check
          %p389 = pneg %p127
        $region54: #{tpu_custom_call.1} parent=43 // pred_check_branch
          %391 = sbr.rel (%p389) target = $region56
        $region55: #{tpu_custom_call.1} parent=43 // pred_region
          %392 = dma.done %s385, 2048
        $region56: #{tpu_custom_call.1} parent=43 // pred_fallthru
          _
        %s393 = sand.u32 %s192, 1
        %s394 = scalar_lea.sflag [#allocation12], %s393
        %s395 = sand.u32 %s192, 1
        %s396 = smul.addr %s395, 256
        %s397 = scalar_lea.vmem [#allocation11], %s396
        // Predicated region
        $region57: #{tpu_custom_call.1} parent=43 // pred_check
          %p398 = pneg %p205
        $region58: #{tpu_custom_call.1} parent=43 // pred_check_branch
          %400 = sbr.rel (%p398) target = $region60
        $region59: #{tpu_custom_call.1} parent=43 // pred_region
          %401 = dma.done %s394, 4096
        $region60: #{tpu_custom_call.1} parent=43 // pred_fallthru
          _
        %s402 = sand.u32 %s58, 1
        %s403 = scalar_lea.sflag [#allocation6], %s402
        %s404 = sand.u32 %s58, 1
        %s405 = smul.addr %s404, 64
        %s406 = scalar_lea.vmem [#allocation5], %s405
        %p407 = pneg %p71
        %p408 = pneg %p68
        %s409 = sand.u32 %s29, 1
        %s410 = scalar_lea.sflag [#allocation9], %s409
        %s411 = sand.u32 %s86, 1
        %s412 = smul.addr %s411, 128
        %s413 = scalar_lea.vmem [#allocation8], %s412
        %p414 = pneg %p99
        %p415 = pneg %p96
        %s416 = sand.u32 %s29, 1
        %s417 = scalar_lea.sflag [#allocation9], %s416
        %s418 = sand.u32 %s114, 1
        %s419 = smul.addr %s418, 128
        %s420 = scalar_lea.vmem [#allocation10], %s419
        %p421 = pneg %p127
        %p422 = pneg %p124
        %s423 = smul.u32 2, %s35
        %p424 = scmp.lt.s32.totalorder %s423, 3
        %s425 = scalar_select %p424, %s423, 3
        %s426 = scalar_lea.vmem %s3, %s425
        %p427 = pneg %p153
        %p428 = pneg %p150
        %s429 = smul.u32 2, %s35
        %p430 = scmp.lt.s32.totalorder %s429, 3
        %s431 = scalar_select %p430, %s429, 3
        %s432 = scalar_lea.vmem %s4, %s431
        %p433 = pneg %p179
        %p434 = pneg %p176
        %s435 = sand.u32 %s192, 1
        %s436 = scalar_lea.sflag [#allocation12], %s435
        %s437 = sand.u32 %s192, 1
        %s438 = smul.addr %s437, 256
        %s439 = scalar_lea.vmem [#allocation11], %s438
        %p440 = pneg %p205
        %p441 = pneg %p202
        %p442 = pneg %p231
        %p443 = pneg %p228
        %s444 = sand.u32 %s218, 1
        %s445 = scalar_lea.sflag [#allocation7], %s444
        %s446 = sand.u32 %s218, 1
        %s447 = smul.addr %s446, 256
        %s448 = scalar_lea.vmem [#allocation13], %s447
        %s449 = smul.u32 16, %s34
        %s450 = smul.u32 16, %s36
        %s451 = smul.u32 2, %s35
        %s452 = smul.u32 16, %s36
        %s453 = smul.u32 2, %s35
        %s454 = smul.u32 2, %s35
        %p455 = scmp.lt.s32.totalorder %s454, 3
        %s456 = scalar_select %p455, %s454, 3
        %s457 = scalar_lea.vmem %s3, %s456
        %s458 = smul.u32 2, %s35
        %s459 = smul.u32 2, %s35
        %p460 = scmp.lt.s32.totalorder %s459, 3
        %s461 = scalar_select %p460, %s459, 3
        %s462 = scalar_lea.vmem %s4, %s461
        %s463 = smul.u32 2, %s35
        %s464 = smul.u32 32, %s35
        %s465 = smul.u32 16, %s34
        %p467 = scmp.eq.s32.totalorder %s35, 0
        %p468 = scmp.eq.s32.totalorder %s36, 0
        %p469 = pnand %p467, %p468
        %p470 = pneg %p469
        // Predicated region
        $region61: #{tpu_custom_call.1} parent=43 // pred_check
          _
        $region62: #{tpu_custom_call.1} parent=43 // pred_check_branch
          %472 = sbr.rel (%p469) target = $region64
        $region63: #{tpu_custom_call.1} parent=43 // pred_region
          %473 = vst [vmem:[#allocation4] sm:$0xff] 0.0
          %474 = vst [vmem:[#allocation4 + $0x8] sm:$0xff] 0.0
          %475 = vst [vmem:[#allocation4 + $0x10] sm:$0xff] 0.0
          %476 = vst [vmem:[#allocation4 + $0x18] sm:$0xff] 0.0
          %477 = vst [vmem:[#allocation4 + $0x20] sm:$0xff] 0.0
          %478 = vst [vmem:[#allocation4 + $0x28] sm:$0xff] 0.0
          %479 = vst [vmem:[#allocation4 + $0x30] sm:$0xff] 0.0
          %480 = vst [vmem:[#allocation4 + $0x38] sm:$0xff] 0.0
          %481 = vst [vmem:[#allocation4 + $0x40] sm:$0xff] 0.0
          %482 = vst [vmem:[#allocation4 + $0x48] sm:$0xff] 0.0
          %483 = vst [vmem:[#allocation4 + $0x50] sm:$0xff] 0.0
          %484 = vst [vmem:[#allocation4 + $0x58] sm:$0xff] 0.0
          %485 = vst [vmem:[#allocation4 + $0x60] sm:$0xff] 0.0
          %486 = vst [vmem:[#allocation4 + $0x68] sm:$0xff] 0.0
          %487 = vst [vmem:[#allocation4 + $0x70] sm:$0xff] 0.0
          %488 = vst [vmem:[#allocation4 + $0x78] sm:$0xff] 0.0
          %489 = vst [vmem:[#allocation4 + $0x80] sm:$0xff] 0.0
          %490 = vst [vmem:[#allocation4 + $0x88] sm:$0xff] 0.0
          %491 = vst [vmem:[#allocation4 + $0x90] sm:$0xff] 0.0
          %492 = vst [vmem:[#allocation4 + $0x98] sm:$0xff] 0.0
          %493 = vst [vmem:[#allocation4 + $0xa0] sm:$0xff] 0.0
          %494 = vst [vmem:[#allocation4 + $0xa8] sm:$0xff] 0.0
          %495 = vst [vmem:[#allocation4 + $0xb0] sm:$0xff] 0.0
          %496 = vst [vmem:[#allocation4 + $0xb8] sm:$0xff] 0.0
          %497 = vst [vmem:[#allocation4 + $0xc0] sm:$0xff] 0.0
          %498 = vst [vmem:[#allocation4 + $0xc8] sm:$0xff] 0.0
          %499 = vst [vmem:[#allocation4 + $0xd0] sm:$0xff] 0.0
          %500 = vst [vmem:[#allocation4 + $0xd8] sm:$0xff] 0.0
          %501 = vst [vmem:[#allocation4 + $0xe0] sm:$0xff] 0.0
          %502 = vst [vmem:[#allocation4 + $0xe8] sm:$0xff] 0.0
          %503 = vst [vmem:[#allocation4 + $0xf0] sm:$0xff] 0.0
          %504 = vst [vmem:[#allocation4 + $0xf8] sm:$0xff] 0.0
        $region64: #{tpu_custom_call.1} parent=43 // pred_fallthru
          _
        // Predicated region
        $region65: #{tpu_custom_call.1} parent=43 // pred_check
          %p505 = pneg %p468
        $region66: #{tpu_custom_call.1} parent=43 // pred_check_branch
          %507 = sbr.rel (%p505) target = $region68
        $region67: #{tpu_custom_call.1} parent=43 // pred_region
          %508 = vst [vmem:[#allocation2] sm:$0xff] 0.0
          %509 = vst [vmem:[#allocation2 + $0x8] sm:$0xff] 0.0
          %510 = vst [vmem:[#allocation2 + $0x10] sm:$0xff] 0.0
          %511 = vst [vmem:[#allocation2 + $0x18] sm:$0xff] 0.0
          %512 = vst [vmem:[#allocation2 + $0x20] sm:$0xff] 0.0
          %513 = vst [vmem:[#allocation2 + $0x28] sm:$0xff] 0.0
          %514 = vst [vmem:[#allocation2 + $0x30] sm:$0xff] 0.0
          %515 = vst [vmem:[#allocation2 + $0x38] sm:$0xff] 0.0
          %516 = vst [vmem:[#allocation2 + $0x40] sm:$0xff] 0.0
          %517 = vst [vmem:[#allocation2 + $0x48] sm:$0xff] 0.0
          %518 = vst [vmem:[#allocation2 + $0x50] sm:$0xff] 0.0
          %519 = vst [vmem:[#allocation2 + $0x58] sm:$0xff] 0.0
          %520 = vst [vmem:[#allocation2 + $0x60] sm:$0xff] 0.0
          %521 = vst [vmem:[#allocation2 + $0x68] sm:$0xff] 0.0
          %522 = vst [vmem:[#allocation2 + $0x70] sm:$0xff] 0.0
          %523 = vst [vmem:[#allocation2 + $0x78] sm:$0xff] 0.0
          %524 = vst [vmem:[#allocation2 + $0x80] sm:$0xff] 0.0
          %525 = vst [vmem:[#allocation2 + $0x88] sm:$0xff] 0.0
          %526 = vst [vmem:[#allocation2 + $0x90] sm:$0xff] 0.0
          %527 = vst [vmem:[#allocation2 + $0x98] sm:$0xff] 0.0
          %528 = vst [vmem:[#allocation2 + $0xa0] sm:$0xff] 0.0
          %529 = vst [vmem:[#allocation2 + $0xa8] sm:$0xff] 0.0
          %530 = vst [vmem:[#allocation2 + $0xb0] sm:$0xff] 0.0
          %531 = vst [vmem:[#allocation2 + $0xb8] sm:$0xff] 0.0
          %532 = vst [vmem:[#allocation2 + $0xc0] sm:$0xff] 0.0
          %533 = vst [vmem:[#allocation2 + $0xc8] sm:$0xff] 0.0
          %534 = vst [vmem:[#allocation2 + $0xd0] sm:$0xff] 0.0
          %535 = vst [vmem:[#allocation2 + $0xd8] sm:$0xff] 0.0
          %536 = vst [vmem:[#allocation2 + $0xe0] sm:$0xff] 0.0
          %537 = vst [vmem:[#allocation2 + $0xe8] sm:$0xff] 0.0
          %538 = vst [vmem:[#allocation2 + $0xf0] sm:$0xff] 0.0
          %539 = vst [vmem:[#allocation2 + $0xf8] sm:$0xff] 0.0
          %540 = vst [vmem:[#allocation3] sm:$0xff] 0.0
          %541 = vst [vmem:[#allocation3 + $0x8] sm:$0xff] 0.0
          %542 = vst [vmem:[#allocation3 + $0x10] sm:$0xff] 0.0
          %543 = vst [vmem:[#allocation3 + $0x18] sm:$0xff] 0.0
          %544 = vst [vmem:[#allocation3 + $0x20] sm:$0xff] 0.0
          %545 = vst [vmem:[#allocation3 + $0x28] sm:$0xff] 0.0
          %546 = vst [vmem:[#allocation3 + $0x30] sm:$0xff] 0.0
          %547 = vst [vmem:[#allocation3 + $0x38] sm:$0xff] 0.0
          %548 = vst [vmem:[#allocation3 + $0x40] sm:$0xff] 0.0
          %549 = vst [vmem:[#allocation3 + $0x48] sm:$0xff] 0.0
          %550 = vst [vmem:[#allocation3 + $0x50] sm:$0xff] 0.0
          %551 = vst [vmem:[#allocation3 + $0x58] sm:$0xff] 0.0
          %552 = vst [vmem:[#allocation3 + $0x60] sm:$0xff] 0.0
          %553 = vst [vmem:[#allocation3 + $0x68] sm:$0xff] 0.0
          %554 = vst [vmem:[#allocation3 + $0x70] sm:$0xff] 0.0
          %555 = vst [vmem:[#allocation3 + $0x78] sm:$0xff] 0.0
          %556 = vst [vmem:[#allocation3 + $0x80] sm:$0xff] 0.0
          %557 = vst [vmem:[#allocation3 + $0x88] sm:$0xff] 0.0
          %558 = vst [vmem:[#allocation3 + $0x90] sm:$0xff] 0.0
          %559 = vst [vmem:[#allocation3 + $0x98] sm:$0xff] 0.0
          %560 = vst [vmem:[#allocation3 + $0xa0] sm:$0xff] 0.0
          %561 = vst [vmem:[#allocation3 + $0xa8] sm:$0xff] 0.0
          %562 = vst [vmem:[#allocation3 + $0xb0] sm:$0xff] 0.0
          %563 = vst [vmem:[#allocation3 + $0xb8] sm:$0xff] 0.0
          %564 = vst [vmem:[#allocation3 + $0xc0] sm:$0xff] 0.0
          %565 = vst [vmem:[#allocation3 + $0xc8] sm:$0xff] 0.0
          %566 = vst [vmem:[#allocation3 + $0xd0] sm:$0xff] 0.0
          %567 = vst [vmem:[#allocation3 + $0xd8] sm:$0xff] 0.0
          %568 = vst [vmem:[#allocation3 + $0xe0] sm:$0xff] 0.0
          %569 = vst [vmem:[#allocation3 + $0xe8] sm:$0xff] 0.0
          %570 = vst [vmem:[#allocation3 + $0xf0] sm:$0xff] 0.0
          %571 = vst [vmem:[#allocation3 + $0xf8] sm:$0xff] 0.0
        $region68: #{tpu_custom_call.1} parent=43 // pred_fallthru
          _
        %v572 = vld [vmem:[%s370] sm:$0xf]
        %v573 = vld [vmem:[%s370 + $0x4] sm:$0xf]
        %v574 = vld [vmem:[%s370 + $0x8] sm:$0xf]
        %v575 = vld [vmem:[%s370 + $0xc] sm:$0xf]
        %v576 = vld [vmem:[%s370 + $0x10] sm:$0xf]
        %v577 = vld [vmem:[%s370 + $0x14] sm:$0xf]
        %v578 = vld [vmem:[%s370 + $0x18] sm:$0xf]
        %v579 = vld [vmem:[%s370 + $0x1c] sm:$0xf]
        %v580 = vld [vmem:[%s370 + $0x20] sm:$0xf]
        %v581 = vld [vmem:[%s370 + $0x24] sm:$0xf]
        %v582 = vld [vmem:[%s370 + $0x28] sm:$0xf]
        %v583 = vld [vmem:[%s370 + $0x2c] sm:$0xf]
        %v584 = vld [vmem:[%s370 + $0x30] sm:$0xf]
        %v585 = vld [vmem:[%s370 + $0x34] sm:$0xf]
        %v586 = vld [vmem:[%s370 + $0x38] sm:$0xf]
        %v587 = vld [vmem:[%s370 + $0x3c] sm:$0xf]
        %v588 = vld [vmem:[#allocation2] sm:$0xff]
        %v589 = vld [vmem:[#allocation2 + $0x8] sm:$0xff]
        %v590 = vld [vmem:[#allocation2 + $0x10] sm:$0xff]
        %v591 = vld [vmem:[#allocation2 + $0x18] sm:$0xff]
        %v592 = vld [vmem:[#allocation2 + $0x20] sm:$0xff]
        %v593 = vld [vmem:[#allocation2 + $0x28] sm:$0xff]
        %v594 = vld [vmem:[#allocation2 + $0x30] sm:$0xff]
        %v595 = vld [vmem:[#allocation2 + $0x38] sm:$0xff]
        %v596 = vld [vmem:[#allocation2 + $0x40] sm:$0xff]
        %v597 = vld [vmem:[#allocation2 + $0x48] sm:$0xff]
        %v598 = vld [vmem:[#allocation2 + $0x50] sm:$0xff]
        %v599 = vld [vmem:[#allocation2 + $0x58] sm:$0xff]
        %v600 = vld [vmem:[#allocation2 + $0x60] sm:$0xff]
        %v601 = vld [vmem:[#allocation2 + $0x68] sm:$0xff]
        %v602 = vld [vmem:[#allocation2 + $0x70] sm:$0xff]
        %v603 = vld [vmem:[#allocation2 + $0x78] sm:$0xff]
        %v604 = vld [vmem:[#allocation2 + $0x80] sm:$0xff]
        %v605 = vld [vmem:[#allocation2 + $0x88] sm:$0xff]
        %v606 = vld [vmem:[#allocation2 + $0x90] sm:$0xff]
        %v607 = vld [vmem:[#allocation2 + $0x98] sm:$0xff]
        %v608 = vld [vmem:[#allocation2 + $0xa0] sm:$0xff]
        %v609 = vld [vmem:[#allocation2 + $0xa8] sm:$0xff]
        %v610 = vld [vmem:[#allocation2 + $0xb0] sm:$0xff]
        %v611 = vld [vmem:[#allocation2 + $0xb8] sm:$0xff]
        %v612 = vld [vmem:[#allocation2 + $0xc0] sm:$0xff]
        %v613 = vld [vmem:[#allocation2 + $0xc8] sm:$0xff]
        %v614 = vld [vmem:[#allocation2 + $0xd0] sm:$0xff]
        %v615 = vld [vmem:[#allocation2 + $0xd8] sm:$0xff]
        %v616 = vld [vmem:[#allocation2 + $0xe0] sm:$0xff]
        %v617 = vld [vmem:[#allocation2 + $0xe8] sm:$0xff]
        %v618 = vld [vmem:[#allocation2 + $0xf0] sm:$0xff]
        %v619 = vld [vmem:[#allocation2 + $0xf8] sm:$0xff]
        %v620 = vld [vmem:[%s379] sm:$0xff]
        %v621 = vld [vmem:[%s379 + $0x8] sm:$0xff]
        %v622 = vld [vmem:[%s379 + $0x10] sm:$0xff]
        %v623 = vld [vmem:[%s379 + $0x18] sm:$0xff]
        %v624 = vld [vmem:[%s379 + $0x20] sm:$0xff]
        %v625 = vld [vmem:[%s379 + $0x28] sm:$0xff]
        %v626 = vld [vmem:[%s379 + $0x30] sm:$0xff]
        %v627 = vld [vmem:[%s379 + $0x38] sm:$0xff]
        %v628 = vld [vmem:[%s379 + $0x40] sm:$0xff]
        %v629 = vld [vmem:[%s379 + $0x48] sm:$0xff]
        %v630 = vld [vmem:[%s379 + $0x50] sm:$0xff]
        %v631 = vld [vmem:[%s379 + $0x58] sm:$0xff]
        %v632 = vld [vmem:[%s379 + $0x60] sm:$0xff]
        %v633 = vld [vmem:[%s379 + $0x68] sm:$0xff]
        %v634 = vld [vmem:[%s379 + $0x70] sm:$0xff]
        %v635 = vld [vmem:[%s379 + $0x78] sm:$0xff]
        %v652 = vunpack.c.l.b16 %v572
        %v653 = vunpack.c.l.b16 %v573
        %v654 = vunpack.c.l.b16 %v574
        %v655 = vunpack.c.l.b16 %v575
        %v656 = vunpack.c.l.b16 %v576
        %v657 = vunpack.c.l.b16 %v577
        %v658 = vunpack.c.l.b16 %v578
        %v659 = vunpack.c.l.b16 %v579
        %v660 = vunpack.c.l.b16 %v580
        %v661 = vunpack.c.l.b16 %v581
        %v662 = vunpack.c.l.b16 %v582
        %v663 = vunpack.c.l.b16 %v583
        %v664 = vunpack.c.l.b16 %v584
        %v665 = vunpack.c.l.b16 %v585
        %v666 = vunpack.c.l.b16 %v586
        %v667 = vunpack.c.l.b16 %v587
        %v668 = vpack.c.b16 %v653, %v652
        %v669 = vpack.c.b16 %v655, %v654
        %v670 = vpack.c.b16 %v657, %v656
        %v671 = vpack.c.b16 %v659, %v658
        %v672 = vpack.c.b16 %v661, %v660
        %v673 = vpack.c.b16 %v663, %v662
        %v674 = vpack.c.b16 %v665, %v664
        %v675 = vpack.c.b16 %v667, %v666
        %v700 = vunpack.c.l.b16 %v620
        %v701 = vunpack.c.h.b16 %v620
        %v702 = vunpack.c.l.b16 %v621
        %v703 = vunpack.c.h.b16 %v621
        %v704 = vunpack.c.l.b16 %v622
        %v705 = vunpack.c.h.b16 %v622
        %v706 = vunpack.c.l.b16 %v623
        %v707 = vunpack.c.h.b16 %v623
        %v708 = vunpack.c.l.b16 %v624
        %v709 = vunpack.c.h.b16 %v624
        %v710 = vunpack.c.l.b16 %v625
        %v711 = vunpack.c.h.b16 %v625
        %v712 = vunpack.c.l.b16 %v626
        %v713 = vunpack.c.h.b16 %v626
        %v714 = vunpack.c.l.b16 %v627
        %v715 = vunpack.c.h.b16 %v627
        %v716 = vunpack.c.l.b16 %v628
        %v717 = vunpack.c.h.b16 %v628
        %v718 = vunpack.c.l.b16 %v629
        %v719 = vunpack.c.h.b16 %v629
        %v720 = vunpack.c.l.b16 %v630
        %v721 = vunpack.c.h.b16 %v630
        %v722 = vunpack.c.l.b16 %v631
        %v723 = vunpack.c.h.b16 %v631
        %v724 = vunpack.c.l.b16 %v632
        %v725 = vunpack.c.h.b16 %v632
        %v726 = vunpack.c.l.b16 %v633
        %v727 = vunpack.c.h.b16 %v633
        %v728 = vunpack.c.l.b16 %v634
        %v729 = vunpack.c.h.b16 %v634
        %v730 = vunpack.c.l.b16 %v635
        %v731 = vunpack.c.h.b16 %v635
        %v732 = vpack.c.b16 %v702, %v700
        %v733 = vpack.c.b16 %v703, %v701
        %v734 = vpack.c.b16 %v706, %v704
        %v735 = vpack.c.b16 %v707, %v705
        %v736 = vpack.c.b16 %v710, %v708
        %v737 = vpack.c.b16 %v711, %v709
        %v738 = vpack.c.b16 %v714, %v712
        %v739 = vpack.c.b16 %v715, %v713
        %v740 = vpack.c.b16 %v718, %v716
        %v741 = vpack.c.b16 %v719, %v717
        %v742 = vpack.c.b16 %v722, %v720
        %v743 = vpack.c.b16 %v723, %v721
        %v744 = vpack.c.b16 %v726, %v724
        %v745 = vpack.c.b16 %v727, %v725
        %v746 = vpack.c.b16 %v730, %v728
        %v747 = vpack.c.b16 %v731, %v729
        %764 = vmatprep.subr.bf16.mxu0 %v733
        %765 = vmatpush1.bf16.msra.mxu0 %v732
        %766 = vmatprep.subr.bf16.mxu0 %v735
        %767 = vmatpush1.bf16.msra.mxu0 %v734
        %768 = vmatprep.subr.bf16.mxu0 %v737
        %769 = vmatpush1.bf16.msra.mxu0 %v736
        %770 = vmatprep.subr.bf16.mxu0 %v739
        %771 = vmatpush1.bf16.msra.mxu0 %v738
        %772 = vmatprep.subr.bf16.mxu0 %v741
        %773 = vmatpush1.bf16.msra.mxu0 %v740
        %774 = vmatprep.subr.bf16.mxu0 %v743
        %775 = vmatpush1.bf16.msra.mxu0 %v742
        %776 = vmatprep.subr.bf16.mxu0 %v745
        %777 = vmatpush1.bf16.msra.mxu0 %v744
        %778 = vmatprep.subr.bf16.mxu0 %v747
        %779 = vmatpush1.bf16.msra.mxu0 %v746
        %780 = vmatprep.subr.bf16.mxu0 0
        %781 = vmatpush1.bf16.msra.mxu0 0
        %782 = vmatprep.subr.bf16.mxu0 0
        %783 = vmatpush1.bf16.msra.mxu0 0
        %784 = vmatprep.subr.bf16.mxu0 0
        %785 = vmatpush1.bf16.msra.mxu0 0
        %786 = vmatprep.subr.bf16.mxu0 0
        %787 = vmatpush1.bf16.msra.mxu0 0
        %788 = vmatprep.subr.bf16.mxu0 0
        %789 = vmatpush1.bf16.msra.mxu0 0
        %790 = vmatprep.subr.bf16.mxu0 0
        %791 = vmatpush1.bf16.msra.mxu0 0
        %792 = vmatprep.subr.bf16.mxu0 0
        %793 = vmatpush1.bf16.msra.mxu0 0
        %794 = vmatprep.subr.bf16.mxu0 0
        %795 = vmatpush1.bf16.msra.mxu0 0
        %796 = vmatprep.mubr.bf16.mxu0 0
        %797 = vmatmul.mubr.bf16.gmra.mrb[0].mxu0 %v668
        %v798 = vpop.f32.mrb[0].mxu0
        %v799 = vadd.f32 0.0, %v798
        %v800 = vpop.f32.mrb[0].mxu0
        %v801 = vadd.f32 0.0, %v800
        %v802 = vpop.f32.mrb[0].mxu0
        %v803 = vadd.f32 0.0, %v802
        %v804 = vpop.f32.mrb[0].mxu0
        %v805 = vadd.f32 0.0, %v804
        %806 = vmatprep.mubr.bf16.mxu0 0
        %807 = vmatmul.mubr.bf16.gmra.mrb[0].mxu0 %v669
        %v808 = vpop.f32.mrb[0].mxu0
        %v809 = vadd.f32 0.0, %v808
        %v810 = vpop.f32.mrb[0].mxu0
        %v811 = vadd.f32 0.0, %v810
        %v812 = vpop.f32.mrb[0].mxu0
        %v813 = vadd.f32 0.0, %v812
        %v814 = vpop.f32.mrb[0].mxu0
        %v815 = vadd.f32 0.0, %v814
        %816 = vmatprep.mubr.bf16.mxu0 0
        %817 = vmatmul.mubr.bf16.gmra.mrb[0].mxu0 %v670
        %v818 = vpop.f32.mrb[0].mxu0
        %v819 = vadd.f32 0.0, %v818
        %v820 = vpop.f32.mrb[0].mxu0
        %v821 = vadd.f32 0.0, %v820
        %v822 = vpop.f32.mrb[0].mxu0
        %v823 = vadd.f32 0.0, %v822
        %v824 = vpop.f32.mrb[0].mxu0
        %v825 = vadd.f32 0.0, %v824
        %826 = vmatprep.mubr.bf16.mxu0 0
        %827 = vmatmul.mubr.bf16.gmra.mrb[0].mxu0 %v671
        %v828 = vpop.f32.mrb[0].mxu0
        %v829 = vadd.f32 0.0, %v828
        %v830 = vpop.f32.mrb[0].mxu0
        %v831 = vadd.f32 0.0, %v830
        %v832 = vpop.f32.mrb[0].mxu0
        %v833 = vadd.f32 0.0, %v832
        %v834 = vpop.f32.mrb[0].mxu0
        %v835 = vadd.f32 0.0, %v834
        %836 = vmatprep.mubr.bf16.mxu0 0
        %837 = vmatmul.mubr.bf16.gmra.mrb[0].mxu0 %v672
        %v838 = vpop.f32.mrb[0].mxu0
        %v839 = vadd.f32 0.0, %v838
        %v840 = vpop.f32.mrb[0].mxu0
        %v841 = vadd.f32 0.0, %v840
        %v842 = vpop.f32.mrb[0].mxu0
        %v843 = vadd.f32 0.0, %v842
        %v844 = vpop.f32.mrb[0].mxu0
        %v845 = vadd.f32 0.0, %v844
        %846 = vmatprep.mubr.bf16.mxu0 0
        %847 = vmatmul.mubr.bf16.gmra.mrb[0].mxu0 %v673
        %v848 = vpop.f32.mrb[0].mxu0
        %v849 = vadd.f32 0.0, %v848
        %v850 = vpop.f32.mrb[0].mxu0
        %v851 = vadd.f32 0.0, %v850
        %v852 = vpop.f32.mrb[0].mxu0
        %v853 = vadd.f32 0.0, %v852
        %v854 = vpop.f32.mrb[0].mxu0
        %v855 = vadd.f32 0.0, %v854
        %856 = vmatprep.mubr.bf16.mxu0 0
        %857 = vmatmul.mubr.bf16.gmra.mrb[0].mxu0 %v674
        %v858 = vpop.f32.mrb[0].mxu0
        %v859 = vadd.f32 0.0, %v858
        %v860 = vpop.f32.mrb[0].mxu0
        %v861 = vadd.f32 0.0, %v860
        %v862 = vpop.f32.mrb[0].mxu0
        %v863 = vadd.f32 0.0, %v862
        %v864 = vpop.f32.mrb[0].mxu0
        %v865 = vadd.f32 0.0, %v864
        %866 = vmatprep.mubr.bf16.mxu0 0
        %867 = vmatmul.mubr.bf16.gmra.mrb[0].mxu0 %v675
        %v868 = vpop.f32.mrb[0].mxu0
        %v869 = vadd.f32 0.0, %v868
        %v870 = vpop.f32.mrb[0].mxu0
        %v871 = vadd.f32 0.0, %v870
        %v872 = vpop.f32.mrb[0].mxu0
        %v873 = vadd.f32 0.0, %v872
        %v874 = vpop.f32.mrb[0].mxu0
        %v875 = vadd.f32 0.0, %v874
        %876 = vdwg.mxu0
        %v877 = vadd.f32 %v588, %v799
        %v878 = vadd.f32 %v589, %v801
        %v879 = vadd.f32 %v590, %v803
        %v880 = vadd.f32 %v591, %v805
        %v881 = vadd.f32 %v592, %v809
        %v882 = vadd.f32 %v593, %v811
        %v883 = vadd.f32 %v594, %v813
        %v884 = vadd.f32 %v595, %v815
        %v885 = vadd.f32 %v596, %v819
        %v886 = vadd.f32 %v597, %v821
        %v887 = vadd.f32 %v598, %v823
        %v888 = vadd.f32 %v599, %v825
        %v889 = vadd.f32 %v600, %v829
        %v890 = vadd.f32 %v601, %v831
        %v891 = vadd.f32 %v602, %v833
        %v892 = vadd.f32 %v603, %v835
        %v893 = vadd.f32 %v604, %v839
        %v894 = vadd.f32 %v605, %v841
        %v895 = vadd.f32 %v606, %v843
        %v896 = vadd.f32 %v607, %v845
        %v897 = vadd.f32 %v608, %v849
        %v898 = vadd.f32 %v609, %v851
        %v899 = vadd.f32 %v610, %v853
        %v900 = vadd.f32 %v611, %v855
        %v901 = vadd.f32 %v612, %v859
        %v902 = vadd.f32 %v613, %v861
        %v903 = vadd.f32 %v614, %v863
        %v904 = vadd.f32 %v615, %v865
        %v905 = vadd.f32 %v616, %v869
        %v906 = vadd.f32 %v617, %v871
        %v907 = vadd.f32 %v618, %v873
        %v908 = vadd.f32 %v619, %v875
        %909 = vst [vmem:[#allocation2] sm:$0xff] %v877
        %910 = vst [vmem:[#allocation2 + $0x8] sm:$0xff] %v878
        %911 = vst [vmem:[#allocation2 + $0x10] sm:$0xff] %v879
        %912 = vst [vmem:[#allocation2 + $0x18] sm:$0xff] %v880
        %913 = vst [vmem:[#allocation2 + $0x20] sm:$0xff] %v881
        %914 = vst [vmem:[#allocation2 + $0x28] sm:$0xff] %v882
        %915 = vst [vmem:[#allocation2 + $0x30] sm:$0xff] %v883
        %916 = vst [vmem:[#allocation2 + $0x38] sm:$0xff] %v884
        %917 = vst [vmem:[#allocation2 + $0x40] sm:$0xff] %v885
        %918 = vst [vmem:[#allocation2 + $0x48] sm:$0xff] %v886
        %919 = vst [vmem:[#allocation2 + $0x50] sm:$0xff] %v887
        %920 = vst [vmem:[#allocation2 + $0x58] sm:$0xff] %v888
        %921 = vst [vmem:[#allocation2 + $0x60] sm:$0xff] %v889
        %922 = vst [vmem:[#allocation2 + $0x68] sm:$0xff] %v890
        %923 = vst [vmem:[#allocation2 + $0x70] sm:$0xff] %v891
        %924 = vst [vmem:[#allocation2 + $0x78] sm:$0xff] %v892
        %925 = vst [vmem:[#allocation2 + $0x80] sm:$0xff] %v893
        %926 = vst [vmem:[#allocation2 + $0x88] sm:$0xff] %v894
        %927 = vst [vmem:[#allocation2 + $0x90] sm:$0xff] %v895
        %928 = vst [vmem:[#allocation2 + $0x98] sm:$0xff] %v896
        %929 = vst [vmem:[#allocation2 + $0xa0] sm:$0xff] %v897
        %930 = vst [vmem:[#allocation2 + $0xa8] sm:$0xff] %v898
        %931 = vst [vmem:[#allocation2 + $0xb0] sm:$0xff] %v899
        %932 = vst [vmem:[#allocation2 + $0xb8] sm:$0xff] %v900
        %933 = vst [vmem:[#allocation2 + $0xc0] sm:$0xff] %v901
        %934 = vst [vmem:[#allocation2 + $0xc8] sm:$0xff] %v902
        %935 = vst [vmem:[#allocation2 + $0xd0] sm:$0xff] %v903
        %936 = vst [vmem:[#allocation2 + $0xd8] sm:$0xff] %v904
        %937 = vst [vmem:[#allocation2 + $0xe0] sm:$0xff] %v905
        %938 = vst [vmem:[#allocation2 + $0xe8] sm:$0xff] %v906
        %939 = vst [vmem:[#allocation2 + $0xf0] sm:$0xff] %v907
        %940 = vst [vmem:[#allocation2 + $0xf8] sm:$0xff] %v908
        %v941 = vld [vmem:[#allocation3] sm:$0xff]
        %v942 = vld [vmem:[#allocation3 + $0x8] sm:$0xff]
        %v943 = vld [vmem:[#allocation3 + $0x10] sm:$0xff]
        %v944 = vld [vmem:[#allocation3 + $0x18] sm:$0xff]
        %v945 = vld [vmem:[#allocation3 + $0x20] sm:$0xff]
        %v946 = vld [vmem:[#allocation3 + $0x28] sm:$0xff]
        %v947 = vld [vmem:[#allocation3 + $0x30] sm:$0xff]
        %v948 = vld [vmem:[#allocation3 + $0x38] sm:$0xff]
        %v949 = vld [vmem:[#allocation3 + $0x40] sm:$0xff]
        %v950 = vld [vmem:[#allocation3 + $0x48] sm:$0xff]
        %v951 = vld [vmem:[#allocation3 + $0x50] sm:$0xff]
        %v952 = vld [vmem:[#allocation3 + $0x58] sm:$0xff]
        %v953 = vld [vmem:[#allocation3 + $0x60] sm:$0xff]
        %v954 = vld [vmem:[#allocation3 + $0x68] sm:$0xff]
        %v955 = vld [vmem:[#allocation3 + $0x70] sm:$0xff]
        %v956 = vld [vmem:[#allocation3 + $0x78] sm:$0xff]
        %v957 = vld [vmem:[#allocation3 + $0x80] sm:$0xff]
        %v958 = vld [vmem:[#allocation3 + $0x88] sm:$0xff]
        %v959 = vld [vmem:[#allocation3 + $0x90] sm:$0xff]
        %v960 = vld [vmem:[#allocation3 + $0x98] sm:$0xff]
        %v961 = vld [vmem:[#allocation3 + $0xa0] sm:$0xff]
        %v962 = vld [vmem:[#allocation3 + $0xa8] sm:$0xff]
        %v963 = vld [vmem:[#allocation3 + $0xb0] sm:$0xff]
        %v964 = vld [vmem:[#allocation3 + $0xb8] sm:$0xff]
        %v965 = vld [vmem:[#allocation3 + $0xc0] sm:$0xff]
        %v966 = vld [vmem:[#allocation3 + $0xc8] sm:$0xff]
        %v967 = vld [vmem:[#allocation3 + $0xd0] sm:$0xff]
        %v968 = vld [vmem:[#allocation3 + $0xd8] sm:$0xff]
        %v969 = vld [vmem:[#allocation3 + $0xe0] sm:$0xff]
        %v970 = vld [vmem:[#allocation3 + $0xe8] sm:$0xff]
        %v971 = vld [vmem:[#allocation3 + $0xf0] sm:$0xff]
        %v972 = vld [vmem:[#allocation3 + $0xf8] sm:$0xff]
        %v973 = vld [vmem:[%s388] sm:$0xff]
        %v974 = vld [vmem:[%s388 + $0x8] sm:$0xff]
        %v975 = vld [vmem:[%s388 + $0x10] sm:$0xff]
        %v976 = vld [vmem:[%s388 + $0x18] sm:$0xff]
        %v977 = vld [vmem:[%s388 + $0x20] sm:$0xff]
        %v978 = vld [vmem:[%s388 + $0x28] sm:$0xff]
        %v979 = vld [vmem:[%s388 + $0x30] sm:$0xff]
        %v980 = vld [vmem:[%s388 + $0x38] sm:$0xff]
        %v981 = vld [vmem:[%s388 + $0x40] sm:$0xff]
        %v982 = vld [vmem:[%s388 + $0x48] sm:$0xff]
        %v983 = vld [vmem:[%s388 + $0x50] sm:$0xff]
        %v984 = vld [vmem:[%s388 + $0x58] sm:$0xff]
        %v985 = vld [vmem:[%s388 + $0x60] sm:$0xff]
        %v986 = vld [vmem:[%s388 + $0x68] sm:$0xff]
        %v987 = vld [vmem:[%s388 + $0x70] sm:$0xff]
        %v988 = vld [vmem:[%s388 + $0x78] sm:$0xff]
        %v1005 = vunpack.c.l.b16 %v973
        %v1006 = vunpack.c.h.b16 %v973
        %v1007 = vunpack.c.l.b16 %v974
        %v1008 = vunpack.c.h.b16 %v974
        %v1009 = vunpack.c.l.b16 %v975
        %v1010 = vunpack.c.h.b16 %v975
        %v1011 = vunpack.c.l.b16 %v976
        %v1012 = vunpack.c.h.b16 %v976
        %v1013 = vunpack.c.l.b16 %v977
        %v1014 = vunpack.c.h.b16 %v977
        %v1015 = vunpack.c.l.b16 %v978
        %v1016 = vunpack.c.h.b16 %v978
        %v1017 = vunpack.c.l.b16 %v979
        %v1018 = vunpack.c.h.b16 %v979
        %v1019 = vunpack.c.l.b16 %v980
        %v1020 = vunpack.c.h.b16 %v980
        %v1021 = vunpack.c.l.b16 %v981
        %v1022 = vunpack.c.h.b16 %v981
        %v1023 = vunpack.c.l.b16 %v982
        %v1024 = vunpack.c.h.b16 %v982
        %v1025 = vunpack.c.l.b16 %v983
        %v1026 = vunpack.c.h.b16 %v983
        %v1027 = vunpack.c.l.b16 %v984
        %v1028 = vunpack.c.h.b16 %v984
        %v1029 = vunpack.c.l.b16 %v985
        %v1030 = vunpack.c.h.b16 %v985
        %v1031 = vunpack.c.l.b16 %v986
        %v1032 = vunpack.c.h.b16 %v986
        %v1033 = vunpack.c.l.b16 %v987
        %v1034 = vunpack.c.h.b16 %v987
        %v1035 = vunpack.c.l.b16 %v988
        %v1036 = vunpack.c.h.b16 %v988
        %v1037 = vpack.c.b16 %v1007, %v1005
        %v1038 = vpack.c.b16 %v1008, %v1006
        %v1039 = vpack.c.b16 %v1011, %v1009
        %v1040 = vpack.c.b16 %v1012, %v1010
        %v1041 = vpack.c.b16 %v1015, %v1013
        %v1042 = vpack.c.b16 %v1016, %v1014
        %v1043 = vpack.c.b16 %v1019, %v1017
        %v1044 = vpack.c.b16 %v1020, %v1018
        %v1045 = vpack.c.b16 %v1023, %v1021
        %v1046 = vpack.c.b16 %v1024, %v1022
        %v1047 = vpack.c.b16 %v1027, %v1025
        %v1048 = vpack.c.b16 %v1028, %v1026
        %v1049 = vpack.c.b16 %v1031, %v1029
        %v1050 = vpack.c.b16 %v1032, %v1030
        %v1051 = vpack.c.b16 %v1035, %v1033
        %v1052 = vpack.c.b16 %v1036, %v1034
        %1069 = vmatprep.subr.bf16.mxu0 %v1038
        %1070 = vmatpush1.bf16.msra.mxu0 %v1037
        %1071 = vmatprep.subr.bf16.mxu0 %v1040
        %1072 = vmatpush1.bf16.msra.mxu0 %v1039
        %1073 = vmatprep.subr.bf16.mxu0 %v1042
        %1074 = vmatpush1.bf16.msra.mxu0 %v1041
        %1075 = vmatprep.subr.bf16.mxu0 %v1044
        %1076 = vmatpush1.bf16.msra.mxu0 %v1043
        %1077 = vmatprep.subr.bf16.mxu0 %v1046
        %1078 = vmatpush1.bf16.msra.mxu0 %v1045
        %1079 = vmatprep.subr.bf16.mxu0 %v1048
        %1080 = vmatpush1.bf16.msra.mxu0 %v1047
        %1081 = vmatprep.subr.bf16.mxu0 %v1050
        %1082 = vmatpush1.bf16.msra.mxu0 %v1049
        %1083 = vmatprep.subr.bf16.mxu0 %v1052
        %1084 = vmatpush1.bf16.msra.mxu0 %v1051
        %1085 = vmatprep.subr.bf16.mxu0 0
        %1086 = vmatpush1.bf16.msra.mxu0 0
        %1087 = vmatprep.subr.bf16.mxu0 0
        %1088 = vmatpush1.bf16.msra.mxu0 0
        %1089 = vmatprep.subr.bf16.mxu0 0
        %1090 = vmatpush1.bf16.msra.mxu0 0
        %1091 = vmatprep.subr.bf16.mxu0 0
        %1092 = vmatpush1.bf16.msra.mxu0 0
        %1093 = vmatprep.subr.bf16.mxu0 0
        %1094 = vmatpush1.bf16.msra.mxu0 0
        %1095 = vmatprep.subr.bf16.mxu0 0
        %1096 = vmatpush1.bf16.msra.mxu0 0
        %1097 = vmatprep.subr.bf16.mxu0 0
        %1098 = vmatpush1.bf16.msra.mxu0 0
        %1099 = vmatprep.subr.bf16.mxu0 0
        %1100 = vmatpush1.bf16.msra.mxu0 0
        %1101 = vmatprep.mubr.bf16.mxu0 0
        %1102 = vmatmul.mubr.bf16.gmra.mrb[0].mxu0 %v668
        %v1103 = vpop.f32.mrb[0].mxu0
        %v1104 = vadd.f32 0.0, %v1103
        %v1105 = vpop.f32.mrb[0].mxu0
        %v1106 = vadd.f32 0.0, %v1105
        %v1107 = vpop.f32.mrb[0].mxu0
        %v1108 = vadd.f32 0.0, %v1107
        %v1109 = vpop.f32.mrb[0].mxu0
        %v1110 = vadd.f32 0.0, %v1109
        %1111 = vmatprep.mubr.bf16.mxu0 0
        %1112 = vmatmul.mubr.bf16.gmra.mrb[0].mxu0 %v669
        %v1113 = vpop.f32.mrb[0].mxu0
        %v1114 = vadd.f32 0.0, %v1113
        %v1115 = vpop.f32.mrb[0].mxu0
        %v1116 = vadd.f32 0.0, %v1115
        %v1117 = vpop.f32.mrb[0].mxu0
        %v1118 = vadd.f32 0.0, %v1117
        %v1119 = vpop.f32.mrb[0].mxu0
        %v1120 = vadd.f32 0.0, %v1119
        %1121 = vmatprep.mubr.bf16.mxu0 0
        %1122 = vmatmul.mubr.bf16.gmra.mrb[0].mxu0 %v670
        %v1123 = vpop.f32.mrb[0].mxu0
        %v1124 = vadd.f32 0.0, %v1123
        %v1125 = vpop.f32.mrb[0].mxu0
        %v1126 = vadd.f32 0.0, %v1125
        %v1127 = vpop.f32.mrb[0].mxu0
        %v1128 = vadd.f32 0.0, %v1127
        %v1129 = vpop.f32.mrb[0].mxu0
        %v1130 = vadd.f32 0.0, %v1129
        %1131 = vmatprep.mubr.bf16.mxu0 0
        %1132 = vmatmul.mubr.bf16.gmra.mrb[0].mxu0 %v671
        %v1133 = vpop.f32.mrb[0].mxu0
        %v1134 = vadd.f32 0.0, %v1133
        %v1135 = vpop.f32.mrb[0].mxu0
        %v1136 = vadd.f32 0.0, %v1135
        %v1137 = vpop.f32.mrb[0].mxu0
        %v1138 = vadd.f32 0.0, %v1137
        %v1139 = vpop.f32.mrb[0].mxu0
        %v1140 = vadd.f32 0.0, %v1139
        %1141 = vmatprep.mubr.bf16.mxu0 0
        %1142 = vmatmul.mubr.bf16.gmra.mrb[0].mxu0 %v672
        %v1143 = vpop.f32.mrb[0].mxu0
        %v1144 = vadd.f32 0.0, %v1143
        %v1145 = vpop.f32.mrb[0].mxu0
        %v1146 = vadd.f32 0.0, %v1145
        %v1147 = vpop.f32.mrb[0].mxu0
        %v1148 = vadd.f32 0.0, %v1147
        %v1149 = vpop.f32.mrb[0].mxu0
        %v1150 = vadd.f32 0.0, %v1149
        %1151 = vmatprep.mubr.bf16.mxu0 0
        %1152 = vmatmul.mubr.bf16.gmra.mrb[0].mxu0 %v673
        %v1153 = vpop.f32.mrb[0].mxu0
        %v1154 = vadd.f32 0.0, %v1153
        %v1155 = vpop.f32.mrb[0].mxu0
        %v1156 = vadd.f32 0.0, %v1155
        %v1157 = vpop.f32.mrb[0].mxu0
        %v1158 = vadd.f32 0.0, %v1157
        %v1159 = vpop.f32.mrb[0].mxu0
        %v1160 = vadd.f32 0.0, %v1159
        %1161 = vmatprep.mubr.bf16.mxu0 0
        %1162 = vmatmul.mubr.bf16.gmra.mrb[0].mxu0 %v674
        %v1163 = vpop.f32.mrb[0].mxu0
        %v1164 = vadd.f32 0.0, %v1163
        %v1165 = vpop.f32.mrb[0].mxu0
        %v1166 = vadd.f32 0.0, %v1165
        %v1167 = vpop.f32.mrb[0].mxu0
        %v1168 = vadd.f32 0.0, %v1167
        %v1169 = vpop.f32.mrb[0].mxu0
        %v1170 = vadd.f32 0.0, %v1169
        %1171 = vmatprep.mubr.bf16.mxu0 0
        %1172 = vmatmul.mubr.bf16.gmra.mrb[0].mxu0 %v675
        %v1173 = vpop.f32.mrb[0].mxu0
        %v1174 = vadd.f32 0.0, %v1173
        %v1175 = vpop.f32.mrb[0].mxu0
        %v1176 = vadd.f32 0.0, %v1175
        %v1177 = vpop.f32.mrb[0].mxu0
        %v1178 = vadd.f32 0.0, %v1177
        %v1179 = vpop.f32.mrb[0].mxu0
        %v1180 = vadd.f32 0.0, %v1179
        %1181 = vdwg.mxu0
        %v1182 = vadd.f32 %v941, %v1104
        %v1183 = vadd.f32 %v942, %v1106
        %v1184 = vadd.f32 %v943, %v1108
        %v1185 = vadd.f32 %v944, %v1110
        %v1186 = vadd.f32 %v945, %v1114
        %v1187 = vadd.f32 %v946, %v1116
        %v1188 = vadd.f32 %v947, %v1118
        %v1189 = vadd.f32 %v948, %v1120
        %v1190 = vadd.f32 %v949, %v1124
        %v1191 = vadd.f32 %v950, %v1126
        %v1192 = vadd.f32 %v951, %v1128
        %v1193 = vadd.f32 %v952, %v1130
        %v1194 = vadd.f32 %v953, %v1134
        %v1195 = vadd.f32 %v954, %v1136
        %v1196 = vadd.f32 %v955, %v1138
        %v1197 = vadd.f32 %v956, %v1140
        %v1198 = vadd.f32 %v957, %v1144
        %v1199 = vadd.f32 %v958, %v1146
        %v1200 = vadd.f32 %v959, %v1148
        %v1201 = vadd.f32 %v960, %v1150
        %v1202 = vadd.f32 %v961, %v1154
        %v1203 = vadd.f32 %v962, %v1156
        %v1204 = vadd.f32 %v963, %v1158
        %v1205 = vadd.f32 %v964, %v1160
        %v1206 = vadd.f32 %v965, %v1164
        %v1207 = vadd.f32 %v966, %v1166
        %v1208 = vadd.f32 %v967, %v1168
        %v1209 = vadd.f32 %v968, %v1170
        %v1210 = vadd.f32 %v969, %v1174
        %v1211 = vadd.f32 %v970, %v1176
        %v1212 = vadd.f32 %v971, %v1178
        %v1213 = vadd.f32 %v972, %v1180
        %1214 = vst [vmem:[#allocation3] sm:$0xff] %v1182
        %1215 = vst [vmem:[#allocation3 + $0x8] sm:$0xff] %v1183
        %1216 = vst [vmem:[#allocation3 + $0x10] sm:$0xff] %v1184
        %1217 = vst [vmem:[#allocation3 + $0x18] sm:$0xff] %v1185
        %1218 = vst [vmem:[#allocation3 + $0x20] sm:$0xff] %v1186
        %1219 = vst [vmem:[#allocation3 + $0x28] sm:$0xff] %v1187
        %1220 = vst [vmem:[#allocation3 + $0x30] sm:$0xff] %v1188
        %1221 = vst [vmem:[#allocation3 + $0x38] sm:$0xff] %v1189
        %1222 = vst [vmem:[#allocation3 + $0x40] sm:$0xff] %v1190
        %1223 = vst [vmem:[#allocation3 + $0x48] sm:$0xff] %v1191
        %1224 = vst [vmem:[#allocation3 + $0x50] sm:$0xff] %v1192
        %1225 = vst [vmem:[#allocation3 + $0x58] sm:$0xff] %v1193
        %1226 = vst [vmem:[#allocation3 + $0x60] sm:$0xff] %v1194
        %1227 = vst [vmem:[#allocation3 + $0x68] sm:$0xff] %v1195
        %1228 = vst [vmem:[#allocation3 + $0x70] sm:$0xff] %v1196
        %1229 = vst [vmem:[#allocation3 + $0x78] sm:$0xff] %v1197
        %1230 = vst [vmem:[#allocation3 + $0x80] sm:$0xff] %v1198
        %1231 = vst [vmem:[#allocation3 + $0x88] sm:$0xff] %v1199
        %1232 = vst [vmem:[#allocation3 + $0x90] sm:$0xff] %v1200
        %1233 = vst [vmem:[#allocation3 + $0x98] sm:$0xff] %v1201
        %1234 = vst [vmem:[#allocation3 + $0xa0] sm:$0xff] %v1202
        %1235 = vst [vmem:[#allocation3 + $0xa8] sm:$0xff] %v1203
        %1236 = vst [vmem:[#allocation3 + $0xb0] sm:$0xff] %v1204
        %1237 = vst [vmem:[#allocation3 + $0xb8] sm:$0xff] %v1205
        %1238 = vst [vmem:[#allocation3 + $0xc0] sm:$0xff] %v1206
        %1239 = vst [vmem:[#allocation3 + $0xc8] sm:$0xff] %v1207
        %1240 = vst [vmem:[#allocation3 + $0xd0] sm:$0xff] %v1208
        %1241 = vst [vmem:[#allocation3 + $0xd8] sm:$0xff] %v1209
        %1242 = vst [vmem:[#allocation3 + $0xe0] sm:$0xff] %v1210
        %1243 = vst [vmem:[#allocation3 + $0xe8] sm:$0xff] %v1211
        %1244 = vst [vmem:[#allocation3 + $0xf0] sm:$0xff] %v1212
        %1245 = vst [vmem:[#allocation3 + $0xf8] sm:$0xff] %v1213
        %p1246 = scmp.eq.s32.totalorder %s36, 1
        // Predicated region
        $region69: #{tpu_custom_call.1} parent=43 // pred_check
          %p1247 = pneg %p1246
        $region70: #{tpu_custom_call.1} parent=43 // pred_check_branch
          %1249 = sbr.rel (%p1247) target = $region72
        $region71: #{tpu_custom_call.1} parent=43 // pred_region
          %v1250 = vld [vmem:[#allocation2] sm:$0xff]
          %v1251 = vld [vmem:[#allocation2 + $0x8] sm:$0xff]
          %v1252 = vld [vmem:[#allocation2 + $0x10] sm:$0xff]
          %v1253 = vld [vmem:[#allocation2 + $0x18] sm:$0xff]
          %v1254 = vld [vmem:[#allocation2 + $0x20] sm:$0xff]
          %v1255 = vld [vmem:[#allocation2 + $0x28] sm:$0xff]
          %v1256 = vld [vmem:[#allocation2 + $0x30] sm:$0xff]
          %v1257 = vld [vmem:[#allocation2 + $0x38] sm:$0xff]
          %v1258 = vld [vmem:[#allocation2 + $0x40] sm:$0xff]
          %v1259 = vld [vmem:[#allocation2 + $0x48] sm:$0xff]
          %v1260 = vld [vmem:[#allocation2 + $0x50] sm:$0xff]
          %v1261 = vld [vmem:[#allocation2 + $0x58] sm:$0xff]
          %v1262 = vld [vmem:[#allocation2 + $0x60] sm:$0xff]
          %v1263 = vld [vmem:[#allocation2 + $0x68] sm:$0xff]
          %v1264 = vld [vmem:[#allocation2 + $0x70] sm:$0xff]
          %v1265 = vld [vmem:[#allocation2 + $0x78] sm:$0xff]
          %v1266 = vld [vmem:[#allocation2 + $0x80] sm:$0xff]
          %v1267 = vld [vmem:[#allocation2 + $0x88] sm:$0xff]
          %v1268 = vld [vmem:[#allocation2 + $0x90] sm:$0xff]
          %v1269 = vld [vmem:[#allocation2 + $0x98] sm:$0xff]
          %v1270 = vld [vmem:[#allocation2 + $0xa0] sm:$0xff]
          %v1271 = vld [vmem:[#allocation2 + $0xa8] sm:$0xff]
          %v1272 = vld [vmem:[#allocation2 + $0xb0] sm:$0xff]
          %v1273 = vld [vmem:[#allocation2 + $0xb8] sm:$0xff]
          %v1274 = vld [vmem:[#allocation2 + $0xc0] sm:$0xff]
          %v1275 = vld [vmem:[#allocation2 + $0xc8] sm:$0xff]
          %v1276 = vld [vmem:[#allocation2 + $0xd0] sm:$0xff]
          %v1277 = vld [vmem:[#allocation2 + $0xd8] sm:$0xff]
          %v1278 = vld [vmem:[#allocation2 + $0xe0] sm:$0xff]
          %v1279 = vld [vmem:[#allocation2 + $0xe8] sm:$0xff]
          %v1280 = vld [vmem:[#allocation2 + $0xf0] sm:$0xff]
          %v1281 = vld [vmem:[#allocation2 + $0xf8] sm:$0xff]
          %v1282 = vld [vmem:[%s457] sm:$0x3]
          %v1284 = vlaneseq
          %v1285 = vshrl.u32 %v1284, 7
          %v1286 = vsub.s32 0, %v1285
          %v1287 = vrot.slane %v1282, %v1286
          %v1288 = vlaneseq
          %v1289 = vshrl.u32 %v1288, 7
          %v1290 = vsub.s32 1, %v1289
          %v1291 = vrot.slane %v1282, %v1290
          %v1294 = vmul.f32 %v1250, %v1287
          %v1295 = vmul.f32 %v1251, %v1291
          %v1296 = vmul.f32 %v1252, %v1287
          %v1297 = vmul.f32 %v1253, %v1291
          %v1298 = vmul.f32 %v1254, %v1287
          %v1299 = vmul.f32 %v1255, %v1291
          %v1300 = vmul.f32 %v1256, %v1287
          %v1301 = vmul.f32 %v1257, %v1291
          %v1302 = vmul.f32 %v1258, %v1287
          %v1303 = vmul.f32 %v1259, %v1291
          %v1304 = vmul.f32 %v1260, %v1287
          %v1305 = vmul.f32 %v1261, %v1291
          %v1306 = vmul.f32 %v1262, %v1287
          %v1307 = vmul.f32 %v1263, %v1291
          %v1308 = vmul.f32 %v1264, %v1287
          %v1309 = vmul.f32 %v1265, %v1291
          %v1310 = vmul.f32 %v1266, %v1287
          %v1311 = vmul.f32 %v1267, %v1291
          %v1312 = vmul.f32 %v1268, %v1287
          %v1313 = vmul.f32 %v1269, %v1291
          %v1314 = vmul.f32 %v1270, %v1287
          %v1315 = vmul.f32 %v1271, %v1291
          %v1316 = vmul.f32 %v1272, %v1287
          %v1317 = vmul.f32 %v1273, %v1291
          %v1318 = vmul.f32 %v1274, %v1287
          %v1319 = vmul.f32 %v1275, %v1291
          %v1320 = vmul.f32 %v1276, %v1287
          %v1321 = vmul.f32 %v1277, %v1291
          %v1322 = vmul.f32 %v1278, %v1287
          %v1323 = vmul.f32 %v1279, %v1291
          %v1324 = vmul.f32 %v1280, %v1287
          %v1325 = vmul.f32 %v1281, %v1291
          %v1326 = vld [vmem:[#allocation3] sm:$0xff]
          %v1327 = vld [vmem:[#allocation3 + $0x8] sm:$0xff]
          %v1328 = vld [vmem:[#allocation3 + $0x10] sm:$0xff]
          %v1329 = vld [vmem:[#allocation3 + $0x18] sm:$0xff]
          %v1330 = vld [vmem:[#allocation3 + $0x20] sm:$0xff]
          %v1331 = vld [vmem:[#allocation3 + $0x28] sm:$0xff]
          %v1332 = vld [vmem:[#allocation3 + $0x30] sm:$0xff]
          %v1333 = vld [vmem:[#allocation3 + $0x38] sm:$0xff]
          %v1334 = vld [vmem:[#allocation3 + $0x40] sm:$0xff]
          %v1335 = vld [vmem:[#allocation3 + $0x48] sm:$0xff]
          %v1336 = vld [vmem:[#allocation3 + $0x50] sm:$0xff]
          %v1337 = vld [vmem:[#allocation3 + $0x58] sm:$0xff]
          %v1338 = vld [vmem:[#allocation3 + $0x60] sm:$0xff]
          %v1339 = vld [vmem:[#allocation3 + $0x68] sm:$0xff]
          %v1340 = vld [vmem:[#allocation3 + $0x70] sm:$0xff]
          %v1341 = vld [vmem:[#allocation3 + $0x78] sm:$0xff]
          %v1342 = vld [vmem:[#allocation3 + $0x80] sm:$0xff]
          %v1343 = vld [vmem:[#allocation3 + $0x88] sm:$0xff]
          %v1344 = vld [vmem:[#allocation3 + $0x90] sm:$0xff]
          %v1345 = vld [vmem:[#allocation3 + $0x98] sm:$0xff]
          %v1346 = vld [vmem:[#allocation3 + $0xa0] sm:$0xff]
          %v1347 = vld [vmem:[#allocation3 + $0xa8] sm:$0xff]
          %v1348 = vld [vmem:[#allocation3 + $0xb0] sm:$0xff]
          %v1349 = vld [vmem:[#allocation3 + $0xb8] sm:$0xff]
          %v1350 = vld [vmem:[#allocation3 + $0xc0] sm:$0xff]
          %v1351 = vld [vmem:[#allocation3 + $0xc8] sm:$0xff]
          %v1352 = vld [vmem:[#allocation3 + $0xd0] sm:$0xff]
          %v1353 = vld [vmem:[#allocation3 + $0xd8] sm:$0xff]
          %v1354 = vld [vmem:[#allocation3 + $0xe0] sm:$0xff]
          %v1355 = vld [vmem:[#allocation3 + $0xe8] sm:$0xff]
          %v1356 = vld [vmem:[#allocation3 + $0xf0] sm:$0xff]
          %v1357 = vld [vmem:[#allocation3 + $0xf8] sm:$0xff]
          %v1358 = vld [vmem:[%s462] sm:$0x3]
          %v1360 = vlaneseq
          %v1361 = vshrl.u32 %v1360, 7
          %v1362 = vsub.s32 0, %v1361
          %v1363 = vrot.slane %v1358, %v1362
          %v1364 = vlaneseq
          %v1365 = vshrl.u32 %v1364, 7
          %v1366 = vsub.s32 1, %v1365
          %v1367 = vrot.slane %v1358, %v1366
          %v1370 = vmul.f32 %v1326, %v1363
          %v1371 = vmul.f32 %v1327, %v1367
          %v1372 = vmul.f32 %v1328, %v1363
          %v1373 = vmul.f32 %v1329, %v1367
          %v1374 = vmul.f32 %v1330, %v1363
          %v1375 = vmul.f32 %v1331, %v1367
          %v1376 = vmul.f32 %v1332, %v1363
          %v1377 = vmul.f32 %v1333, %v1367
          %v1378 = vmul.f32 %v1334, %v1363
          %v1379 = vmul.f32 %v1335, %v1367
          %v1380 = vmul.f32 %v1336, %v1363
          %v1381 = vmul.f32 %v1337, %v1367
          %v1382 = vmul.f32 %v1338, %v1363
          %v1383 = vmul.f32 %v1339, %v1367
          %v1384 = vmul.f32 %v1340, %v1363
          %v1385 = vmul.f32 %v1341, %v1367
          %v1386 = vmul.f32 %v1342, %v1363
          %v1387 = vmul.f32 %v1343, %v1367
          %v1388 = vmul.f32 %v1344, %v1363
          %v1389 = vmul.f32 %v1345, %v1367
          %v1390 = vmul.f32 %v1346, %v1363
          %v1391 = vmul.f32 %v1347, %v1367
          %v1392 = vmul.f32 %v1348, %v1363
          %v1393 = vmul.f32 %v1349, %v1367
          %v1394 = vmul.f32 %v1350, %v1363
          %v1395 = vmul.f32 %v1351, %v1367
          %v1396 = vmul.f32 %v1352, %v1363
          %v1397 = vmul.f32 %v1353, %v1367
          %v1398 = vmul.f32 %v1354, %v1363
          %v1399 = vmul.f32 %v1355, %v1367
          %v1400 = vmul.f32 %v1356, %v1363
          %v1401 = vmul.f32 %v1357, %v1367
          %v1402 = vsub.f32 0.0, %v1370
          %v1403 = vsub.f32 0.0, %v1371
          %v1404 = vsub.f32 0.0, %v1372
          %v1405 = vsub.f32 0.0, %v1373
          %v1406 = vsub.f32 0.0, %v1374
          %v1407 = vsub.f32 0.0, %v1375
          %v1408 = vsub.f32 0.0, %v1376
          %v1409 = vsub.f32 0.0, %v1377
          %v1410 = vsub.f32 0.0, %v1378
          %v1411 = vsub.f32 0.0, %v1379
          %v1412 = vsub.f32 0.0, %v1380
          %v1413 = vsub.f32 0.0, %v1381
          %v1414 = vsub.f32 0.0, %v1382
          %v1415 = vsub.f32 0.0, %v1383
          %v1416 = vsub.f32 0.0, %v1384
          %v1417 = vsub.f32 0.0, %v1385
          %v1418 = vsub.f32 0.0, %v1386
          %v1419 = vsub.f32 0.0, %v1387
          %v1420 = vsub.f32 0.0, %v1388
          %v1421 = vsub.f32 0.0, %v1389
          %v1422 = vsub.f32 0.0, %v1390
          %v1423 = vsub.f32 0.0, %v1391
          %v1424 = vsub.f32 0.0, %v1392
          %v1425 = vsub.f32 0.0, %v1393
          %v1426 = vsub.f32 0.0, %v1394
          %v1427 = vsub.f32 0.0, %v1395
          %v1428 = vsub.f32 0.0, %v1396
          %v1429 = vsub.f32 0.0, %v1397
          %v1430 = vsub.f32 0.0, %v1398
          %v1431 = vsub.f32 0.0, %v1399
          %v1432 = vsub.f32 0.0, %v1400
          %v1433 = vsub.f32 0.0, %v1401
          %v1434 = vmul.f32 %v1402, 1.442695
          %v1435 = vpow.pop %v1434
          %v1436 = vmul.f32 %v1403, 1.442695
          %v1437 = vpow.pop %v1436
          %v1438 = vmul.f32 %v1404, 1.442695
          %v1439 = vpow.pop %v1438
          %v1440 = vmul.f32 %v1405, 1.442695
          %v1441 = vpow.pop %v1440
          %v1442 = vmul.f32 %v1406, 1.442695
          %v1443 = vpow.pop %v1442
          %v1444 = vmul.f32 %v1407, 1.442695
          %v1445 = vpow.pop %v1444
          %v1446 = vmul.f32 %v1408, 1.442695
          %v1447 = vpow.pop %v1446
          %v1448 = vmul.f32 %v1409, 1.442695
          %v1449 = vpow.pop %v1448
          %v1450 = vmul.f32 %v1410, 1.442695
          %v1451 = vpow.pop %v1450
          %v1452 = vmul.f32 %v1411, 1.442695
          %v1453 = vpow.pop %v1452
          %v1454 = vmul.f32 %v1412, 1.442695
          %v1455 = vpow.pop %v1454
          %v1456 = vmul.f32 %v1413, 1.442695
          %v1457 = vpow.pop %v1456
          %v1458 = vmul.f32 %v1414, 1.442695
          %v1459 = vpow.pop %v1458
          %v1460 = vmul.f32 %v1415, 1.442695
          %v1461 = vpow.pop %v1460
          %v1462 = vmul.f32 %v1416, 1.442695
          %v1463 = vpow.pop %v1462
          %v1464 = vmul.f32 %v1417, 1.442695
          %v1465 = vpow.pop %v1464
          %v1466 = vmul.f32 %v1418, 1.442695
          %v1467 = vpow.pop %v1466
          %v1468 = vmul.f32 %v1419, 1.442695
          %v1469 = vpow.pop %v1468
          %v1470 = vmul.f32 %v1420, 1.442695
          %v1471 = vpow.pop %v1470
          %v1472 = vmul.f32 %v1421, 1.442695
          %v1473 = vpow.pop %v1472
          %v1474 = vmul.f32 %v1422, 1.442695
          %v1475 = vpow.pop %v1474
          %v1476 = vmul.f32 %v1423, 1.442695
          %v1477 = vpow.pop %v1476
          %v1478 = vmul.f32 %v1424, 1.442695
          %v1479 = vpow.pop %v1478
          %v1480 = vmul.f32 %v1425, 1.442695
          %v1481 = vpow.pop %v1480
          %v1482 = vmul.f32 %v1426, 1.442695
          %v1483 = vpow.pop %v1482
          %v1484 = vmul.f32 %v1427, 1.442695
          %v1485 = vpow.pop %v1484
          %v1486 = vmul.f32 %v1428, 1.442695
          %v1487 = vpow.pop %v1486
          %v1488 = vmul.f32 %v1429, 1.442695
          %v1489 = vpow.pop %v1488
          %v1490 = vmul.f32 %v1430, 1.442695
          %v1491 = vpow.pop %v1490
          %v1492 = vmul.f32 %v1431, 1.442695
          %v1493 = vpow.pop %v1492
          %v1494 = vmul.f32 %v1432, 1.442695
          %v1495 = vpow.pop %v1494
          %v1496 = vmul.f32 %v1433, 1.442695
          %v1497 = vpow.pop %v1496
          %v1498 = vadd.f32 %v1435, 1.0
          %v1499 = vadd.f32 %v1437, 1.0
          %v1500 = vadd.f32 %v1439, 1.0
          %v1501 = vadd.f32 %v1441, 1.0
          %v1502 = vadd.f32 %v1443, 1.0
          %v1503 = vadd.f32 %v1445, 1.0
          %v1504 = vadd.f32 %v1447, 1.0
          %v1505 = vadd.f32 %v1449, 1.0
          %v1506 = vadd.f32 %v1451, 1.0
          %v1507 = vadd.f32 %v1453, 1.0
          %v1508 = vadd.f32 %v1455, 1.0
          %v1509 = vadd.f32 %v1457, 1.0
          %v1510 = vadd.f32 %v1459, 1.0
          %v1511 = vadd.f32 %v1461, 1.0
          %v1512 = vadd.f32 %v1463, 1.0
          %v1513 = vadd.f32 %v1465, 1.0
          %v1514 = vadd.f32 %v1467, 1.0
          %v1515 = vadd.f32 %v1469, 1.0
          %v1516 = vadd.f32 %v1471, 1.0
          %v1517 = vadd.f32 %v1473, 1.0
          %v1518 = vadd.f32 %v1475, 1.0
          %v1519 = vadd.f32 %v1477, 1.0
          %v1520 = vadd.f32 %v1479, 1.0
          %v1521 = vadd.f32 %v1481, 1.0
          %v1522 = vadd.f32 %v1483, 1.0
          %v1523 = vadd.f32 %v1485, 1.0
          %v1524 = vadd.f32 %v1487, 1.0
          %v1525 = vadd.f32 %v1489, 1.0
          %v1526 = vadd.f32 %v1491, 1.0
          %v1527 = vadd.f32 %v1493, 1.0
          %v1528 = vadd.f32 %v1495, 1.0
          %v1529 = vadd.f32 %v1497, 1.0
          %v1530 = vrcp.pop %v1498
          %v1531 = vrcp.pop %v1499
          %v1532 = vrcp.pop %v1500
          %v1533 = vrcp.pop %v1501
          %v1534 = vrcp.pop %v1502
          %v1535 = vrcp.pop %v1503
          %v1536 = vrcp.pop %v1504
          %v1537 = vrcp.pop %v1505
          %v1538 = vrcp.pop %v1506
          %v1539 = vrcp.pop %v1507
          %v1540 = vrcp.pop %v1508
          %v1541 = vrcp.pop %v1509
          %v1542 = vrcp.pop %v1510
          %v1543 = vrcp.pop %v1511
          %v1544 = vrcp.pop %v1512
          %v1545 = vrcp.pop %v1513
          %v1546 = vrcp.pop %v1514
          %v1547 = vrcp.pop %v1515
          %v1548 = vrcp.pop %v1516
          %v1549 = vrcp.pop %v1517
          %v1550 = vrcp.pop %v1518
          %v1551 = vrcp.pop %v1519
          %v1552 = vrcp.pop %v1520
          %v1553 = vrcp.pop %v1521
          %v1554 = vrcp.pop %v1522
          %v1555 = vrcp.pop %v1523
          %v1556 = vrcp.pop %v1524
          %v1557 = vrcp.pop %v1525
          %v1558 = vrcp.pop %v1526
          %v1559 = vrcp.pop %v1527
          %v1560 = vrcp.pop %v1528
          %v1561 = vrcp.pop %v1529
          %v1562 = vmul.f32 %v1370, %v1530
          %v1563 = vmul.f32 %v1371, %v1531
          %v1564 = vmul.f32 %v1372, %v1532
          %v1565 = vmul.f32 %v1373, %v1533
          %v1566 = vmul.f32 %v1374, %v1534
          %v1567 = vmul.f32 %v1375, %v1535
          %v1568 = vmul.f32 %v1376, %v1536
          %v1569 = vmul.f32 %v1377, %v1537
          %v1570 = vmul.f32 %v1378, %v1538
          %v1571 = vmul.f32 %v1379, %v1539
          %v1572 = vmul.f32 %v1380, %v1540
          %v1573 = vmul.f32 %v1381, %v1541
          %v1574 = vmul.f32 %v1382, %v1542
          %v1575 = vmul.f32 %v1383, %v1543
          %v1576 = vmul.f32 %v1384, %v1544
          %v1577 = vmul.f32 %v1385, %v1545
          %v1578 = vmul.f32 %v1386, %v1546
          %v1579 = vmul.f32 %v1387, %v1547
          %v1580 = vmul.f32 %v1388, %v1548
          %v1581 = vmul.f32 %v1389, %v1549
          %v1582 = vmul.f32 %v1390, %v1550
          %v1583 = vmul.f32 %v1391, %v1551
          %v1584 = vmul.f32 %v1392, %v1552
          %v1585 = vmul.f32 %v1393, %v1553
          %v1586 = vmul.f32 %v1394, %v1554
          %v1587 = vmul.f32 %v1395, %v1555
          %v1588 = vmul.f32 %v1396, %v1556
          %v1589 = vmul.f32 %v1397, %v1557
          %v1590 = vmul.f32 %v1398, %v1558
          %v1591 = vmul.f32 %v1399, %v1559
          %v1592 = vmul.f32 %v1400, %v1560
          %v1593 = vmul.f32 %v1401, %v1561
          %v1594 = vmul.f32 %v1294, %v1562
          %v1595 = vmul.f32 %v1295, %v1563
          %v1596 = vmul.f32 %v1296, %v1564
          %v1597 = vmul.f32 %v1297, %v1565
          %v1598 = vmul.f32 %v1298, %v1566
          %v1599 = vmul.f32 %v1299, %v1567
          %v1600 = vmul.f32 %v1300, %v1568
          %v1601 = vmul.f32 %v1301, %v1569
          %v1602 = vmul.f32 %v1302, %v1570
          %v1603 = vmul.f32 %v1303, %v1571
          %v1604 = vmul.f32 %v1304, %v1572
          %v1605 = vmul.f32 %v1305, %v1573
          %v1606 = vmul.f32 %v1306, %v1574
          %v1607 = vmul.f32 %v1307, %v1575
          %v1608 = vmul.f32 %v1308, %v1576
          %v1609 = vmul.f32 %v1309, %v1577
          %v1610 = vmul.f32 %v1310, %v1578
          %v1611 = vmul.f32 %v1311, %v1579
          %v1612 = vmul.f32 %v1312, %v1580
          %v1613 = vmul.f32 %v1313, %v1581
          %v1614 = vmul.f32 %v1314, %v1582
          %v1615 = vmul.f32 %v1315, %v1583
          %v1616 = vmul.f32 %v1316, %v1584
          %v1617 = vmul.f32 %v1317, %v1585
          %v1618 = vmul.f32 %v1318, %v1586
          %v1619 = vmul.f32 %v1319, %v1587
          %v1620 = vmul.f32 %v1320, %v1588
          %v1621 = vmul.f32 %v1321, %v1589
          %v1622 = vmul.f32 %v1322, %v1590
          %v1623 = vmul.f32 %v1323, %v1591
          %v1624 = vmul.f32 %v1324, %v1592
          %v1625 = vmul.f32 %v1325, %v1593
          %v1626 = vpack.c.bf16 %v1596, %v1594
          %v1627 = vpack.c.bf16 %v1597, %v1595
          %v1628 = vpack.c.bf16 %v1600, %v1598
          %v1629 = vpack.c.bf16 %v1601, %v1599
          %v1630 = vpack.c.bf16 %v1604, %v1602
          %v1631 = vpack.c.bf16 %v1605, %v1603
          %v1632 = vpack.c.bf16 %v1608, %v1606
          %v1633 = vpack.c.bf16 %v1609, %v1607
          %v1634 = vpack.c.bf16 %v1612, %v1610
          %v1635 = vpack.c.bf16 %v1613, %v1611
          %v1636 = vpack.c.bf16 %v1616, %v1614
          %v1637 = vpack.c.bf16 %v1617, %v1615
          %v1638 = vpack.c.bf16 %v1620, %v1618
          %v1639 = vpack.c.bf16 %v1621, %v1619
          %v1640 = vpack.c.bf16 %v1624, %v1622
          %v1641 = vpack.c.bf16 %v1625, %v1623
          %v1642 = vld [vmem:[#allocation4] sm:$0xff]
          %v1643 = vld [vmem:[#allocation4 + $0x8] sm:$0xff]
          %v1644 = vld [vmem:[#allocation4 + $0x10] sm:$0xff]
          %v1645 = vld [vmem:[#allocation4 + $0x18] sm:$0xff]
          %v1646 = vld [vmem:[#allocation4 + $0x20] sm:$0xff]
          %v1647 = vld [vmem:[#allocation4 + $0x28] sm:$0xff]
          %v1648 = vld [vmem:[#allocation4 + $0x30] sm:$0xff]
          %v1649 = vld [vmem:[#allocation4 + $0x38] sm:$0xff]
          %v1650 = vld [vmem:[#allocation4 + $0x40] sm:$0xff]
          %v1651 = vld [vmem:[#allocation4 + $0x48] sm:$0xff]
          %v1652 = vld [vmem:[#allocation4 + $0x50] sm:$0xff]
          %v1653 = vld [vmem:[#allocation4 + $0x58] sm:$0xff]
          %v1654 = vld [vmem:[#allocation4 + $0x60] sm:$0xff]
          %v1655 = vld [vmem:[#allocation4 + $0x68] sm:$0xff]
          %v1656 = vld [vmem:[#allocation4 + $0x70] sm:$0xff]
          %v1657 = vld [vmem:[#allocation4 + $0x78] sm:$0xff]
          %v1658 = vld [vmem:[#allocation4 + $0x80] sm:$0xff]
          %v1659 = vld [vmem:[#allocation4 + $0x88] sm:$0xff]
          %v1660 = vld [vmem:[#allocation4 + $0x90] sm:$0xff]
          %v1661 = vld [vmem:[#allocation4 + $0x98] sm:$0xff]
          %v1662 = vld [vmem:[#allocation4 + $0xa0] sm:$0xff]
          %v1663 = vld [vmem:[#allocation4 + $0xa8] sm:$0xff]
          %v1664 = vld [vmem:[#allocation4 + $0xb0] sm:$0xff]
          %v1665 = vld [vmem:[#allocation4 + $0xb8] sm:$0xff]
          %v1666 = vld [vmem:[#allocation4 + $0xc0] sm:$0xff]
          %v1667 = vld [vmem:[#allocation4 + $0xc8] sm:$0xff]
          %v1668 = vld [vmem:[#allocation4 + $0xd0] sm:$0xff]
          %v1669 = vld [vmem:[#allocation4 + $0xd8] sm:$0xff]
          %v1670 = vld [vmem:[#allocation4 + $0xe0] sm:$0xff]
          %v1671 = vld [vmem:[#allocation4 + $0xe8] sm:$0xff]
          %v1672 = vld [vmem:[#allocation4 + $0xf0] sm:$0xff]
          %v1673 = vld [vmem:[#allocation4 + $0xf8] sm:$0xff]
          %v1674 = vld [vmem:[%s397] sm:$0xff]
          %v1675 = vld [vmem:[%s397 + $0x8] sm:$0xff]
          %v1676 = vld [vmem:[%s397 + $0x10] sm:$0xff]
          %v1677 = vld [vmem:[%s397 + $0x18] sm:$0xff]
          %v1678 = vld [vmem:[%s397 + $0x20] sm:$0xff]
          %v1679 = vld [vmem:[%s397 + $0x28] sm:$0xff]
          %v1680 = vld [vmem:[%s397 + $0x30] sm:$0xff]
          %v1681 = vld [vmem:[%s397 + $0x38] sm:$0xff]
          %v1682 = vld [vmem:[%s397 + $0x40] sm:$0xff]
          %v1683 = vld [vmem:[%s397 + $0x48] sm:$0xff]
          %v1684 = vld [vmem:[%s397 + $0x50] sm:$0xff]
          %v1685 = vld [vmem:[%s397 + $0x58] sm:$0xff]
          %v1686 = vld [vmem:[%s397 + $0x60] sm:$0xff]
          %v1687 = vld [vmem:[%s397 + $0x68] sm:$0xff]
          %v1688 = vld [vmem:[%s397 + $0x70] sm:$0xff]
          %v1689 = vld [vmem:[%s397 + $0x78] sm:$0xff]
          %v1690 = vld [vmem:[%s397 + $0x80] sm:$0xff]
          %v1691 = vld [vmem:[%s397 + $0x88] sm:$0xff]
          %v1692 = vld [vmem:[%s397 + $0x90] sm:$0xff]
          %v1693 = vld [vmem:[%s397 + $0x98] sm:$0xff]
          %v1694 = vld [vmem:[%s397 + $0xa0] sm:$0xff]
          %v1695 = vld [vmem:[%s397 + $0xa8] sm:$0xff]
          %v1696 = vld [vmem:[%s397 + $0xb0] sm:$0xff]
          %v1697 = vld [vmem:[%s397 + $0xb8] sm:$0xff]
          %v1698 = vld [vmem:[%s397 + $0xc0] sm:$0xff]
          %v1699 = vld [vmem:[%s397 + $0xc8] sm:$0xff]
          %v1700 = vld [vmem:[%s397 + $0xd0] sm:$0xff]
          %v1701 = vld [vmem:[%s397 + $0xd8] sm:$0xff]
          %v1702 = vld [vmem:[%s397 + $0xe0] sm:$0xff]
          %v1703 = vld [vmem:[%s397 + $0xe8] sm:$0xff]
          %v1704 = vld [vmem:[%s397 + $0xf0] sm:$0xff]
          %v1705 = vld [vmem:[%s397 + $0xf8] sm:$0xff]
          %v1738 = vunpack.c.l.b16 %v1674
          %v1739 = vunpack.c.h.b16 %v1674
          %v1740 = vunpack.c.l.b16 %v1675
          %v1741 = vunpack.c.h.b16 %v1675
          %v1742 = vunpack.c.l.b16 %v1676
          %v1743 = vunpack.c.h.b16 %v1676
          %v1744 = vunpack.c.l.b16 %v1677
          %v1745 = vunpack.c.h.b16 %v1677
          %v1746 = vunpack.c.l.b16 %v1678
          %v1747 = vunpack.c.h.b16 %v1678
          %v1748 = vunpack.c.l.b16 %v1679
          %v1749 = vunpack.c.h.b16 %v1679
          %v1750 = vunpack.c.l.b16 %v1680
          %v1751 = vunpack.c.h.b16 %v1680
          %v1752 = vunpack.c.l.b16 %v1681
          %v1753 = vunpack.c.h.b16 %v1681
          %v1754 = vunpack.c.l.b16 %v1682
          %v1755 = vunpack.c.h.b16 %v1682
          %v1756 = vunpack.c.l.b16 %v1683
          %v1757 = vunpack.c.h.b16 %v1683
          %v1758 = vunpack.c.l.b16 %v1684
          %v1759 = vunpack.c.h.b16 %v1684
          %v1760 = vunpack.c.l.b16 %v1685
          %v1761 = vunpack.c.h.b16 %v1685
          %v1762 = vunpack.c.l.b16 %v1686
          %v1763 = vunpack.c.h.b16 %v1686
          %v1764 = vunpack.c.l.b16 %v1687
          %v1765 = vunpack.c.h.b16 %v1687
          %v1766 = vunpack.c.l.b16 %v1688
          %v1767 = vunpack.c.h.b16 %v1688
          %v1768 = vunpack.c.l.b16 %v1689
          %v1769 = vunpack.c.h.b16 %v1689
          %v1770 = vunpack.c.l.b16 %v1690
          %v1771 = vunpack.c.h.b16 %v1690
          %v1772 = vunpack.c.l.b16 %v1691
          %v1773 = vunpack.c.h.b16 %v1691
          %v1774 = vunpack.c.l.b16 %v1692
          %v1775 = vunpack.c.h.b16 %v1692
          %v1776 = vunpack.c.l.b16 %v1693
          %v1777 = vunpack.c.h.b16 %v1693
          %v1778 = vunpack.c.l.b16 %v1694
          %v1779 = vunpack.c.h.b16 %v1694
          %v1780 = vunpack.c.l.b16 %v1695
          %v1781 = vunpack.c.h.b16 %v1695
          %v1782 = vunpack.c.l.b16 %v1696
          %v1783 = vunpack.c.h.b16 %v1696
          %v1784 = vunpack.c.l.b16 %v1697
          %v1785 = vunpack.c.h.b16 %v1697
          %v1786 = vunpack.c.l.b16 %v1698
          %v1787 = vunpack.c.h.b16 %v1698
          %v1788 = vunpack.c.l.b16 %v1699
          %v1789 = vunpack.c.h.b16 %v1699
          %v1790 = vunpack.c.l.b16 %v1700
          %v1791 = vunpack.c.h.b16 %v1700
          %v1792 = vunpack.c.l.b16 %v1701
          %v1793 = vunpack.c.h.b16 %v1701
          %v1794 = vunpack.c.l.b16 %v1702
          %v1795 = vunpack.c.h.b16 %v1702
          %v1796 = vunpack.c.l.b16 %v1703
          %v1797 = vunpack.c.h.b16 %v1703
          %v1798 = vunpack.c.l.b16 %v1704
          %v1799 = vunpack.c.h.b16 %v1704
          %v1800 = vunpack.c.l.b16 %v1705
          %v1801 = vunpack.c.h.b16 %v1705
          %v1802 = vpack.c.b16 %v1740, %v1738
          %v1803 = vpack.c.b16 %v1741, %v1739
          %v1804 = vpack.c.b16 %v1744, %v1742
          %v1805 = vpack.c.b16 %v1745, %v1743
          %v1806 = vpack.c.b16 %v1748, %v1746
          %v1807 = vpack.c.b16 %v1749, %v1747
          %v1808 = vpack.c.b16 %v1752, %v1750
          %v1809 = vpack.c.b16 %v1753, %v1751
          %v1810 = vpack.c.b16 %v1756, %v1754
          %v1811 = vpack.c.b16 %v1757, %v1755
          %v1812 = vpack.c.b16 %v1760, %v1758
          %v1813 = vpack.c.b16 %v1761, %v1759
          %v1814 = vpack.c.b16 %v1764, %v1762
          %v1815 = vpack.c.b16 %v1765, %v1763
          %v1816 = vpack.c.b16 %v1768, %v1766
          %v1817 = vpack.c.b16 %v1769, %v1767
          %v1818 = vpack.c.b16 %v1772, %v1770
          %v1819 = vpack.c.b16 %v1773, %v1771
          %v1820 = vpack.c.b16 %v1776, %v1774
          %v1821 = vpack.c.b16 %v1777, %v1775
          %v1822 = vpack.c.b16 %v1780, %v1778
          %v1823 = vpack.c.b16 %v1781, %v1779
          %v1824 = vpack.c.b16 %v1784, %v1782
          %v1825 = vpack.c.b16 %v1785, %v1783
          %v1826 = vpack.c.b16 %v1788, %v1786
          %v1827 = vpack.c.b16 %v1789, %v1787
          %v1828 = vpack.c.b16 %v1792, %v1790
          %v1829 = vpack.c.b16 %v1793, %v1791
          %v1830 = vpack.c.b16 %v1796, %v1794
          %v1831 = vpack.c.b16 %v1797, %v1795
          %v1832 = vpack.c.b16 %v1800, %v1798
          %v1833 = vpack.c.b16 %v1801, %v1799
          %1866 = vmatprep.subr.bf16.mxu0 %v1803
          %1867 = vmatpush1.bf16.msra.mxu0 %v1802
          %1868 = vmatprep.subr.bf16.mxu0 %v1805
          %1869 = vmatpush1.bf16.msra.mxu0 %v1804
          %1870 = vmatprep.subr.bf16.mxu0 %v1807
          %1871 = vmatpush1.bf16.msra.mxu0 %v1806
          %1872 = vmatprep.subr.bf16.mxu0 %v1809
          %1873 = vmatpush1.bf16.msra.mxu0 %v1808
          %1874 = vmatprep.subr.bf16.mxu0 %v1811
          %1875 = vmatpush1.bf16.msra.mxu0 %v1810
          %1876 = vmatprep.subr.bf16.mxu0 %v1813
          %1877 = vmatpush1.bf16.msra.mxu0 %v1812
          %1878 = vmatprep.subr.bf16.mxu0 %v1815
          %1879 = vmatpush1.bf16.msra.mxu0 %v1814
          %1880 = vmatprep.subr.bf16.mxu0 %v1817
          %1881 = vmatpush1.bf16.msra.mxu0 %v1816
          %1882 = vmatprep.subr.bf16.mxu0 %v1819
          %1883 = vmatpush1.bf16.msra.mxu0 %v1818
          %1884 = vmatprep.subr.bf16.mxu0 %v1821
          %1885 = vmatpush1.bf16.msra.mxu0 %v1820
          %1886 = vmatprep.subr.bf16.mxu0 %v1823
          %1887 = vmatpush1.bf16.msra.mxu0 %v1822
          %1888 = vmatprep.subr.bf16.mxu0 %v1825
          %1889 = vmatpush1.bf16.msra.mxu0 %v1824
          %1890 = vmatprep.subr.bf16.mxu0 %v1827
          %1891 = vmatpush1.bf16.msra.mxu0 %v1826
          %1892 = vmatprep.subr.bf16.mxu0 %v1829
          %1893 = vmatpush1.bf16.msra.mxu0 %v1828
          %1894 = vmatprep.subr.bf16.mxu0 %v1831
          %1895 = vmatpush1.bf16.msra.mxu0 %v1830
          %1896 = vmatprep.subr.bf16.mxu0 %v1833
          %1897 = vmatpush1.bf16.msra.mxu0 %v1832
          %1898 = vmatprep.mubr.bf16.mxu0 %v1627
          %1899 = vmatmul.mubr.bf16.gmra.mrb[0].mxu0 %v1626
          %v1900 = vpop.f32.mrb[0].mxu0
          %v1901 = vadd.f32 0.0, %v1900
          %v1902 = vpop.f32.mrb[0].mxu0
          %v1903 = vadd.f32 0.0, %v1902
          %v1904 = vpop.f32.mrb[0].mxu0
          %v1905 = vadd.f32 0.0, %v1904
          %v1906 = vpop.f32.mrb[0].mxu0
          %v1907 = vadd.f32 0.0, %v1906
          %1908 = vmatprep.mubr.bf16.mxu0 %v1629
          %1909 = vmatmul.mubr.bf16.gmra.mrb[0].mxu0 %v1628
          %v1910 = vpop.f32.mrb[0].mxu0
          %v1911 = vadd.f32 0.0, %v1910
          %v1912 = vpop.f32.mrb[0].mxu0
          %v1913 = vadd.f32 0.0, %v1912
          %v1914 = vpop.f32.mrb[0].mxu0
          %v1915 = vadd.f32 0.0, %v1914
          %v1916 = vpop.f32.mrb[0].mxu0
          %v1917 = vadd.f32 0.0, %v1916
          %1918 = vmatprep.mubr.bf16.mxu0 %v1631
          %1919 = vmatmul.mubr.bf16.gmra.mrb[0].mxu0 %v1630
          %v1920 = vpop.f32.mrb[0].mxu0
          %v1921 = vadd.f32 0.0, %v1920
          %v1922 = vpop.f32.mrb[0].mxu0
          %v1923 = vadd.f32 0.0, %v1922
          %v1924 = vpop.f32.mrb[0].mxu0
          %v1925 = vadd.f32 0.0, %v1924
          %v1926 = vpop.f32.mrb[0].mxu0
          %v1927 = vadd.f32 0.0, %v1926
          %1928 = vmatprep.mubr.bf16.mxu0 %v1633
          %1929 = vmatmul.mubr.bf16.gmra.mrb[0].mxu0 %v1632
          %v1930 = vpop.f32.mrb[0].mxu0
          %v1931 = vadd.f32 0.0, %v1930
          %v1932 = vpop.f32.mrb[0].mxu0
          %v1933 = vadd.f32 0.0, %v1932
          %v1934 = vpop.f32.mrb[0].mxu0
          %v1935 = vadd.f32 0.0, %v1934
          %v1936 = vpop.f32.mrb[0].mxu0
          %v1937 = vadd.f32 0.0, %v1936
          %1938 = vmatprep.mubr.bf16.mxu0 %v1635
          %1939 = vmatmul.mubr.bf16.gmra.mrb[0].mxu0 %v1634
          %v1940 = vpop.f32.mrb[0].mxu0
          %v1941 = vadd.f32 0.0, %v1940
          %v1942 = vpop.f32.mrb[0].mxu0
          %v1943 = vadd.f32 0.0, %v1942
          %v1944 = vpop.f32.mrb[0].mxu0
          %v1945 = vadd.f32 0.0, %v1944
          %v1946 = vpop.f32.mrb[0].mxu0
          %v1947 = vadd.f32 0.0, %v1946
          %1948 = vmatprep.mubr.bf16.mxu0 %v1637
          %1949 = vmatmul.mubr.bf16.gmra.mrb[0].mxu0 %v1636
          %v1950 = vpop.f32.mrb[0].mxu0
          %v1951 = vadd.f32 0.0, %v1950
          %v1952 = vpop.f32.mrb[0].mxu0
          %v1953 = vadd.f32 0.0, %v1952
          %v1954 = vpop.f32.mrb[0].mxu0
          %v1955 = vadd.f32 0.0, %v1954
          %v1956 = vpop.f32.mrb[0].mxu0
          %v1957 = vadd.f32 0.0, %v1956
          %1958 = vmatprep.mubr.bf16.mxu0 %v1639
          %1959 = vmatmul.mubr.bf16.gmra.mrb[0].mxu0 %v1638
          %v1960 = vpop.f32.mrb[0].mxu0
          %v1961 = vadd.f32 0.0, %v1960
          %v1962 = vpop.f32.mrb[0].mxu0
          %v1963 = vadd.f32 0.0, %v1962
          %v1964 = vpop.f32.mrb[0].mxu0
          %v1965 = vadd.f32 0.0, %v1964
          %v1966 = vpop.f32.mrb[0].mxu0
          %v1967 = vadd.f32 0.0, %v1966
          %1968 = vmatprep.mubr.bf16.mxu0 %v1641
          %1969 = vmatmul.mubr.bf16.gmra.mrb[0].mxu0 %v1640
          %v1970 = vpop.f32.mrb[0].mxu0
          %v1971 = vadd.f32 0.0, %v1970
          %v1972 = vpop.f32.mrb[0].mxu0
          %v1973 = vadd.f32 0.0, %v1972
          %v1974 = vpop.f32.mrb[0].mxu0
          %v1975 = vadd.f32 0.0, %v1974
          %v1976 = vpop.f32.mrb[0].mxu0
          %v1977 = vadd.f32 0.0, %v1976
          %1978 = vdwg.mxu0
          %v1979 = vadd.f32 %v1642, %v1901
          %v1980 = vadd.f32 %v1643, %v1903
          %v1981 = vadd.f32 %v1644, %v1905
          %v1982 = vadd.f32 %v1645, %v1907
          %v1983 = vadd.f32 %v1646, %v1911
          %v1984 = vadd.f32 %v1647, %v1913
          %v1985 = vadd.f32 %v1648, %v1915
          %v1986 = vadd.f32 %v1649, %v1917
          %v1987 = vadd.f32 %v1650, %v1921
          %v1988 = vadd.f32 %v1651, %v1923
          %v1989 = vadd.f32 %v1652, %v1925
          %v1990 = vadd.f32 %v1653, %v1927
          %v1991 = vadd.f32 %v1654, %v1931
          %v1992 = vadd.f32 %v1655, %v1933
          %v1993 = vadd.f32 %v1656, %v1935
          %v1994 = vadd.f32 %v1657, %v1937
          %v1995 = vadd.f32 %v1658, %v1941
          %v1996 = vadd.f32 %v1659, %v1943
          %v1997 = vadd.f32 %v1660, %v1945
          %v1998 = vadd.f32 %v1661, %v1947
          %v1999 = vadd.f32 %v1662, %v1951
          %v2000 = vadd.f32 %v1663, %v1953
          %v2001 = vadd.f32 %v1664, %v1955
          %v2002 = vadd.f32 %v1665, %v1957
          %v2003 = vadd.f32 %v1666, %v1961
          %v2004 = vadd.f32 %v1667, %v1963
          %v2005 = vadd.f32 %v1668, %v1965
          %v2006 = vadd.f32 %v1669, %v1967
          %v2007 = vadd.f32 %v1670, %v1971
          %v2008 = vadd.f32 %v1671, %v1973
          %v2009 = vadd.f32 %v1672, %v1975
          %v2010 = vadd.f32 %v1673, %v1977
          %2011 = vst [vmem:[#allocation4] sm:$0xff] %v1979
          %2012 = vst [vmem:[#allocation4 + $0x8] sm:$0xff] %v1980
          %2013 = vst [vmem:[#allocation4 + $0x10] sm:$0xff] %v1981
          %2014 = vst [vmem:[#allocation4 + $0x18] sm:$0xff] %v1982
          %2015 = vst [vmem:[#allocation4 + $0x20] sm:$0xff] %v1983
          %2016 = vst [vmem:[#allocation4 + $0x28] sm:$0xff] %v1984
          %2017 = vst [vmem:[#allocation4 + $0x30] sm:$0xff] %v1985
          %2018 = vst [vmem:[#allocation4 + $0x38] sm:$0xff] %v1986
          %2019 = vst [vmem:[#allocation4 + $0x40] sm:$0xff] %v1987
          %2020 = vst [vmem:[#allocation4 + $0x48] sm:$0xff] %v1988
          %2021 = vst [vmem:[#allocation4 + $0x50] sm:$0xff] %v1989
          %2022 = vst [vmem:[#allocation4 + $0x58] sm:$0xff] %v1990
          %2023 = vst [vmem:[#allocation4 + $0x60] sm:$0xff] %v1991
          %2024 = vst [vmem:[#allocation4 + $0x68] sm:$0xff] %v1992
          %2025 = vst [vmem:[#allocation4 + $0x70] sm:$0xff] %v1993
          %2026 = vst [vmem:[#allocation4 + $0x78] sm:$0xff] %v1994
          %2027 = vst [vmem:[#allocation4 + $0x80] sm:$0xff] %v1995
          %2028 = vst [vmem:[#allocation4 + $0x88] sm:$0xff] %v1996
          %2029 = vst [vmem:[#allocation4 + $0x90] sm:$0xff] %v1997
          %2030 = vst [vmem:[#allocation4 + $0x98] sm:$0xff] %v1998
          %2031 = vst [vmem:[#allocation4 + $0xa0] sm:$0xff] %v1999
          %2032 = vst [vmem:[#allocation4 + $0xa8] sm:$0xff] %v2000
          %2033 = vst [vmem:[#allocation4 + $0xb0] sm:$0xff] %v2001
          %2034 = vst [vmem:[#allocation4 + $0xb8] sm:$0xff] %v2002
          %2035 = vst [vmem:[#allocation4 + $0xc0] sm:$0xff] %v2003
          %2036 = vst [vmem:[#allocation4 + $0xc8] sm:$0xff] %v2004
          %2037 = vst [vmem:[#allocation4 + $0xd0] sm:$0xff] %v2005
          %2038 = vst [vmem:[#allocation4 + $0xd8] sm:$0xff] %v2006
          %2039 = vst [vmem:[#allocation4 + $0xe0] sm:$0xff] %v2007
          %2040 = vst [vmem:[#allocation4 + $0xe8] sm:$0xff] %v2008
          %2041 = vst [vmem:[#allocation4 + $0xf0] sm:$0xff] %v2009
          %2042 = vst [vmem:[#allocation4 + $0xf8] sm:$0xff] %v2010
        $region72: #{tpu_custom_call.1} parent=43 // pred_fallthru
          _
        %p2043 = scmp.eq.s32.totalorder %s35, 1
        %p2044 = pnand %p2043, %p1246
        %p2045 = pneg %p2044
        // Predicated region
        $region73: #{tpu_custom_call.1} parent=43 // pred_check
          _
        $region74: #{tpu_custom_call.1} parent=43 // pred_check_branch
          %2047 = sbr.rel (%p2044) target = $region76
        $region75: #{tpu_custom_call.1} parent=43 // pred_region
          %v2048 = vld [vmem:[#allocation4] sm:$0xff]
          %v2049 = vld [vmem:[#allocation4 + $0x8] sm:$0xff]
          %v2050 = vld [vmem:[#allocation4 + $0x10] sm:$0xff]
          %v2051 = vld [vmem:[#allocation4 + $0x18] sm:$0xff]
          %v2052 = vld [vmem:[#allocation4 + $0x20] sm:$0xff]
          %v2053 = vld [vmem:[#allocation4 + $0x28] sm:$0xff]
          %v2054 = vld [vmem:[#allocation4 + $0x30] sm:$0xff]
          %v2055 = vld [vmem:[#allocation4 + $0x38] sm:$0xff]
          %v2056 = vld [vmem:[#allocation4 + $0x40] sm:$0xff]
          %v2057 = vld [vmem:[#allocation4 + $0x48] sm:$0xff]
          %v2058 = vld [vmem:[#allocation4 + $0x50] sm:$0xff]
          %v2059 = vld [vmem:[#allocation4 + $0x58] sm:$0xff]
          %v2060 = vld [vmem:[#allocation4 + $0x60] sm:$0xff]
          %v2061 = vld [vmem:[#allocation4 + $0x68] sm:$0xff]
          %v2062 = vld [vmem:[#allocation4 + $0x70] sm:$0xff]
          %v2063 = vld [vmem:[#allocation4 + $0x78] sm:$0xff]
          %v2064 = vld [vmem:[#allocation4 + $0x80] sm:$0xff]
          %v2065 = vld [vmem:[#allocation4 + $0x88] sm:$0xff]
          %v2066 = vld [vmem:[#allocation4 + $0x90] sm:$0xff]
          %v2067 = vld [vmem:[#allocation4 + $0x98] sm:$0xff]
          %v2068 = vld [vmem:[#allocation4 + $0xa0] sm:$0xff]
          %v2069 = vld [vmem:[#allocation4 + $0xa8] sm:$0xff]
          %v2070 = vld [vmem:[#allocation4 + $0xb0] sm:$0xff]
          %v2071 = vld [vmem:[#allocation4 + $0xb8] sm:$0xff]
          %v2072 = vld [vmem:[#allocation4 + $0xc0] sm:$0xff]
          %v2073 = vld [vmem:[#allocation4 + $0xc8] sm:$0xff]
          %v2074 = vld [vmem:[#allocation4 + $0xd0] sm:$0xff]
          %v2075 = vld [vmem:[#allocation4 + $0xd8] sm:$0xff]
          %v2076 = vld [vmem:[#allocation4 + $0xe0] sm:$0xff]
          %v2077 = vld [vmem:[#allocation4 + $0xe8] sm:$0xff]
          %v2078 = vld [vmem:[#allocation4 + $0xf0] sm:$0xff]
          %v2079 = vld [vmem:[#allocation4 + $0xf8] sm:$0xff]
          %v2080 = vmul.f32 %v2048, %v2048
          %v2081 = vmul.f32 %v2049, %v2049
          %v2082 = vmul.f32 %v2050, %v2050
          %v2083 = vmul.f32 %v2051, %v2051
          %v2084 = vmul.f32 %v2052, %v2052
          %v2085 = vmul.f32 %v2053, %v2053
          %v2086 = vmul.f32 %v2054, %v2054
          %v2087 = vmul.f32 %v2055, %v2055
          %v2088 = vmul.f32 %v2056, %v2056
          %v2089 = vmul.f32 %v2057, %v2057
          %v2090 = vmul.f32 %v2058, %v2058
          %v2091 = vmul.f32 %v2059, %v2059
          %v2092 = vmul.f32 %v2060, %v2060
          %v2093 = vmul.f32 %v2061, %v2061
          %v2094 = vmul.f32 %v2062, %v2062
          %v2095 = vmul.f32 %v2063, %v2063
          %v2096 = vmul.f32 %v2064, %v2064
          %v2097 = vmul.f32 %v2065, %v2065
          %v2098 = vmul.f32 %v2066, %v2066
          %v2099 = vmul.f32 %v2067, %v2067
          %v2100 = vmul.f32 %v2068, %v2068
          %v2101 = vmul.f32 %v2069, %v2069
          %v2102 = vmul.f32 %v2070, %v2070
          %v2103 = vmul.f32 %v2071, %v2071
          %v2104 = vmul.f32 %v2072, %v2072
          %v2105 = vmul.f32 %v2073, %v2073
          %v2106 = vmul.f32 %v2074, %v2074
          %v2107 = vmul.f32 %v2075, %v2075
          %v2108 = vmul.f32 %v2076, %v2076
          %v2109 = vmul.f32 %v2077, %v2077
          %v2110 = vmul.f32 %v2078, %v2078
          %v2111 = vmul.f32 %v2079, %v2079
          %v2112 = vadd.f32 %v2080, %v2081
          %2113 = vadd.xlane.f32.xlu0 %v2112
          %v2114 = vpop.xlane.xlu0 %2113
          %v2115 = vadd.f32 %v2082, %v2083
          %2116 = vadd.xlane.f32.xlu0 %v2115
          %v2117 = vpop.xlane.xlu0 %2116
          %v2118 = vadd.f32 %v2084, %v2085
          %2119 = vadd.xlane.f32.xlu0 %v2118
          %v2120 = vpop.xlane.xlu0 %2119
          %v2121 = vadd.f32 %v2086, %v2087
          %2122 = vadd.xlane.f32.xlu0 %v2121
          %v2123 = vpop.xlane.xlu0 %2122
          %v2124 = vadd.f32 %v2088, %v2089
          %2125 = vadd.xlane.f32.xlu0 %v2124
          %v2126 = vpop.xlane.xlu0 %2125
          %v2127 = vadd.f32 %v2090, %v2091
          %2128 = vadd.xlane.f32.xlu0 %v2127
          %v2129 = vpop.xlane.xlu0 %2128
          %v2130 = vadd.f32 %v2092, %v2093
          %2131 = vadd.xlane.f32.xlu0 %v2130
          %v2132 = vpop.xlane.xlu0 %2131
          %v2133 = vadd.f32 %v2094, %v2095
          %2134 = vadd.xlane.f32.xlu0 %v2133
          %v2135 = vpop.xlane.xlu0 %2134
          %v2136 = vadd.f32 %v2096, %v2097
          %2137 = vadd.xlane.f32.xlu0 %v2136
          %v2138 = vpop.xlane.xlu0 %2137
          %v2139 = vadd.f32 %v2098, %v2099
          %2140 = vadd.xlane.f32.xlu0 %v2139
          %v2141 = vpop.xlane.xlu0 %2140
          %v2142 = vadd.f32 %v2100, %v2101
          %2143 = vadd.xlane.f32.xlu0 %v2142
          %v2144 = vpop.xlane.xlu0 %2143
          %v2145 = vadd.f32 %v2102, %v2103
          %2146 = vadd.xlane.f32.xlu0 %v2145
          %v2147 = vpop.xlane.xlu0 %2146
          %v2148 = vadd.f32 %v2104, %v2105
          %2149 = vadd.xlane.f32.xlu0 %v2148
          %v2150 = vpop.xlane.xlu0 %2149
          %v2151 = vadd.f32 %v2106, %v2107
          %2152 = vadd.xlane.f32.xlu0 %v2151
          %v2153 = vpop.xlane.xlu0 %2152
          %v2154 = vadd.f32 %v2108, %v2109
          %2155 = vadd.xlane.f32.xlu0 %v2154
          %v2156 = vpop.xlane.xlu0 %2155
          %v2157 = vadd.f32 %v2110, %v2111
          %2158 = vadd.xlane.f32.xlu0 %v2157
          %v2159 = vpop.xlane.xlu0 %2158
          %v2160 = vmax.f32 %v2114, 1e-24
          %v2161 = vmax.f32 %v2117, 1e-24
          %v2162 = vmax.f32 %v2120, 1e-24
          %v2163 = vmax.f32 %v2123, 1e-24
          %v2164 = vmax.f32 %v2126, 1e-24
          %v2165 = vmax.f32 %v2129, 1e-24
          %v2166 = vmax.f32 %v2132, 1e-24
          %v2167 = vmax.f32 %v2135, 1e-24
          %v2168 = vmax.f32 %v2138, 1e-24
          %v2169 = vmax.f32 %v2141, 1e-24
          %v2170 = vmax.f32 %v2144, 1e-24
          %v2171 = vmax.f32 %v2147, 1e-24
          %v2172 = vmax.f32 %v2150, 1e-24
          %v2173 = vmax.f32 %v2153, 1e-24
          %v2174 = vmax.f32 %v2156, 1e-24
          %v2175 = vmax.f32 %v2159, 1e-24
          %v2176 = vrsqrt.pop %v2160
          %v2177 = vrsqrt.pop %v2161
          %v2178 = vrsqrt.pop %v2162
          %v2179 = vrsqrt.pop %v2163
          %v2180 = vrsqrt.pop %v2164
          %v2181 = vrsqrt.pop %v2165
          %v2182 = vrsqrt.pop %v2166
          %v2183 = vrsqrt.pop %v2167
          %v2184 = vrsqrt.pop %v2168
          %v2185 = vrsqrt.pop %v2169
          %v2186 = vrsqrt.pop %v2170
          %v2187 = vrsqrt.pop %v2171
          %v2188 = vrsqrt.pop %v2172
          %v2189 = vrsqrt.pop %v2173
          %v2190 = vrsqrt.pop %v2174
          %v2191 = vrsqrt.pop %v2175
          %v2192 = vmul.f32 %v2048, %v2176
          %v2193 = vmul.f32 %v2049, %v2176
          %v2194 = vmul.f32 %v2050, %v2177
          %v2195 = vmul.f32 %v2051, %v2177
          %v2196 = vmul.f32 %v2052, %v2178
          %v2197 = vmul.f32 %v2053, %v2178
          %v2198 = vmul.f32 %v2054, %v2179
          %v2199 = vmul.f32 %v2055, %v2179
          %v2200 = vmul.f32 %v2056, %v2180
          %v2201 = vmul.f32 %v2057, %v2180
          %v2202 = vmul.f32 %v2058, %v2181
          %v2203 = vmul.f32 %v2059, %v2181
          %v2204 = vmul.f32 %v2060, %v2182
          %v2205 = vmul.f32 %v2061, %v2182
          %v2206 = vmul.f32 %v2062, %v2183
          %v2207 = vmul.f32 %v2063, %v2183
          %v2208 = vmul.f32 %v2064, %v2184
          %v2209 = vmul.f32 %v2065, %v2184
          %v2210 = vmul.f32 %v2066, %v2185
          %v2211 = vmul.f32 %v2067, %v2185
          %v2212 = vmul.f32 %v2068, %v2186
          %v2213 = vmul.f32 %v2069, %v2186
          %v2214 = vmul.f32 %v2070, %v2187
          %v2215 = vmul.f32 %v2071, %v2187
          %v2216 = vmul.f32 %v2072, %v2188
          %v2217 = vmul.f32 %v2073, %v2188
          %v2218 = vmul.f32 %v2074, %v2189
          %v2219 = vmul.f32 %v2075, %v2189
          %v2220 = vmul.f32 %v2076, %v2190
          %v2221 = vmul.f32 %v2077, %v2190
          %v2222 = vmul.f32 %v2078, %v2191
          %v2223 = vmul.f32 %v2079, %v2191
          %2224 = vst [vmem:[%s448] sm:$0xff] %v2192
          %2225 = vst [vmem:[%s448 + $0x8] sm:$0xff] %v2193
          %2226 = vst [vmem:[%s448 + $0x10] sm:$0xff] %v2194
          %2227 = vst [vmem:[%s448 + $0x18] sm:$0xff] %v2195
          %2228 = vst [vmem:[%s448 + $0x20] sm:$0xff] %v2196
          %2229 = vst [vmem:[%s448 + $0x28] sm:$0xff] %v2197
          %2230 = vst [vmem:[%s448 + $0x30] sm:$0xff] %v2198
          %2231 = vst [vmem:[%s448 + $0x38] sm:$0xff] %v2199
          %2232 = vst [vmem:[%s448 + $0x40] sm:$0xff] %v2200
          %2233 = vst [vmem:[%s448 + $0x48] sm:$0xff] %v2201
          %2234 = vst [vmem:[%s448 + $0x50] sm:$0xff] %v2202
          %2235 = vst [vmem:[%s448 + $0x58] sm:$0xff] %v2203
          %2236 = vst [vmem:[%s448 + $0x60] sm:$0xff] %v2204
          %2237 = vst [vmem:[%s448 + $0x68] sm:$0xff] %v2205
          %2238 = vst [vmem:[%s448 + $0x70] sm:$0xff] %v2206
          %2239 = vst [vmem:[%s448 + $0x78] sm:$0xff] %v2207
          %2240 = vst [vmem:[%s448 + $0x80] sm:$0xff] %v2208
          %2241 = vst [vmem:[%s448 + $0x88] sm:$0xff] %v2209
          %2242 = vst [vmem:[%s448 + $0x90] sm:$0xff] %v2210
          %2243 = vst [vmem:[%s448 + $0x98] sm:$0xff] %v2211
          %2244 = vst [vmem:[%s448 + $0xa0] sm:$0xff] %v2212
          %2245 = vst [vmem:[%s448 + $0xa8] sm:$0xff] %v2213
          %2246 = vst [vmem:[%s448 + $0xb0] sm:$0xff] %v2214
          %2247 = vst [vmem:[%s448 + $0xb8] sm:$0xff] %v2215
          %2248 = vst [vmem:[%s448 + $0xc0] sm:$0xff] %v2216
          %2249 = vst [vmem:[%s448 + $0xc8] sm:$0xff] %v2217
          %2250 = vst [vmem:[%s448 + $0xd0] sm:$0xff] %v2218
          %2251 = vst [vmem:[%s448 + $0xd8] sm:$0xff] %v2219
          %2252 = vst [vmem:[%s448 + $0xe0] sm:$0xff] %v2220
          %2253 = vst [vmem:[%s448 + $0xe8] sm:$0xff] %v2221
          %2254 = vst [vmem:[%s448 + $0xf0] sm:$0xff] %v2222
          %2255 = vst [vmem:[%s448 + $0xf8] sm:$0xff] %v2223
        $region76: #{tpu_custom_call.1} parent=43 // pred_fallthru
          _
        %s2256 = sand.u32 %s218, 1
        %s2257 = scalar_lea.sflag [#allocation7], %s2256
        %s2258 = sand.u32 %s218, 1
        %s2259 = smul.addr %s2258, 256
        %s2260 = scalar_lea.vmem [#allocation13], %s2259
        // Predicated region
        $region77: #{tpu_custom_call.1} parent=43 // pred_check
          %p2261 = pneg %p228
        $region78: #{tpu_custom_call.1} parent=43 // pred_check_branch
          %2263 = sbr.rel (%p2261) target = $region80
        $region79: #{tpu_custom_call.1} parent=43 // pred_region
          %s2264 = smul.u32 16, %s34
          %s2266 = ssub.s32 4096, 4096
          %2267 = vsyncadd %s2257, %s2266
          %s2268 = smul.addr %s2264, 2
          %s2269 = smul.addr %s2268, 128
          %s2270 = scalar_lea.hbm %s6, %s2269
          %s2271 = sshll.u32 %s2260, 4
          %s2272 = int_to_ptr.vmem [resolvable:$true] %s2271
          %2277 = dma.vmem_to_hbm [thread:$0]  %s2272, 4096, %s2270, %s2257, 256, 256, 16
        $region80: #{tpu_custom_call.1} parent=43 // pred_fallthru
          _
      $region44: #{tpu_custom_call.1} parent=5 // pred_fallthru
        _
      %p2278 = scmp.le.s32.totalorder 2, %s24
      // Predicated region
      $region81: #{tpu_custom_call.1} parent=5 // pred_check
        %p2279 = pneg %p2278
      $region82: #{tpu_custom_call.1} parent=5 // pred_check_branch
        %2281 = sbr.rel (%p2279) target = $region84
      $region83: #{tpu_custom_call.1} parent=5 // pred_region
        %s2282 = ssub.s32 %s24, 2
        // Predicated region
        $region85: #{tpu_custom_call.1} parent=83 // pred_check
          %p2283 = pneg %p234
        $region86: #{tpu_custom_call.1} parent=83 // pred_check_branch
          %2285 = sbr.rel (%p2283) target = $region88
        $region87: #{tpu_custom_call.1} parent=83 // pred_region
          %s2286 = sand.u32 %s219, 1
          %s2287 = scalar_lea.sflag [#allocation7], %s2286
          %s2288 = sand.u32 %s219, 1
          %s2289 = smul.addr %s2288, 256
          %s2290 = scalar_lea.vmem [#allocation13], %s2289
          %2291 = dma.done %s2287, 4096
        $region88: #{tpu_custom_call.1} parent=83 // pred_fallthru
          _
      $region84: #{tpu_custom_call.1} parent=5 // pred_fallthru
        _
    $region6: #{tpu_custom_call.1} parent=1 // loop_footer
      %s28 = sadd.s32 1, %s24
    $region7: #{tpu_custom_call.1} parent=1 // loop_footer_branch
      %23 = sbr.rel target = $region3
    $region8: #{tpu_custom_call.1} parent=1 // loop_exit
      _
    %2292 = vsyncpa [#allocation6], 1
    %s2293 = scalar_lea.sflag [#allocation6], 1
    %2294 = vsyncpa %s2293, 1
    %2295 = vsyncpa [#allocation9], 1
    %s2296 = scalar_lea.sflag [#allocation9], 1
    %2297 = vsyncpa %s2296, 1
    %2298 = vsyncpa [#allocation12], 1
    %s2299 = scalar_lea.sflag [#allocation12], 1
    %2300 = vsyncpa %s2299, 1
    %2301 = vsyncpa [#allocation7], 1
    %s2302 = scalar_lea.sflag [#allocation7], 1
    %2303 = vsyncpa %s2302, 1

</llo_original>
